<compile_context>
chip_gen: v7x
topology: tpu7x:2x2x1
jax: 0.10.0
libtpu: 0.0.40
codegen_flags: <defaults>
</compile_context>

<pallas_src>
import functools

import jax
import jax.numpy as jnp
from jax.experimental import pallas as pl
from jax.experimental.pallas import tpu as pltpu

_LANE_CANDIDATES = (2048, 1024, 512, 256, 128)
_SMALL_BYTES = 1 << 20          # below this, let XLA fuse a plain jnp op
_TARGET_BLOCK_BYTES = 4 << 20   # ~4 MiB per block
_VMEM_LIMIT_BYTES = 32 << 20    # explicit scoped-VMEM limit (safe on all gens)


def _sublane_align(dtype) -> int:
    """Native sublane packing for the dtype (rows of one packed (…,128) tile)."""
    itemsize = jnp.dtype(dtype).itemsize
    return {4: 8, 2: 16, 1: 32}.get(itemsize, 8)


def _jnp_leaky_relu6(x: jax.Array, a_value: float) -> jax.Array:
    a = jnp.asarray(a_value, dtype=x.dtype)
    six = jnp.asarray(6.0, dtype=x.dtype)
    return jnp.minimum(six, jnp.maximum(a * x, x))


def _kernel(x_ref, o_ref, *, a_value):
    xv = x_ref[...]
    a = jnp.asarray(a_value, dtype=xv.dtype)
    six = jnp.asarray(6.0, dtype=xv.dtype)
    o_ref[...] = jnp.minimum(six, jnp.maximum(a * xv, xv))


def _pallas_2d(x2d: jax.Array, a_value: float) -> jax.Array:
    rows, lanes = x2d.shape
    dtype = x2d.dtype
    itemsize = jnp.dtype(dtype).itemsize
    align = _sublane_align(dtype)

    # ~4 MiB blocks, row count aligned to the dtype's sublane packing.
    block_rows = max(align,
                     (_TARGET_BLOCK_BYTES // (lanes * itemsize)) // align * align)
    block_rows = min(block_rows, rows)

    # v7x megacore: guarantee >= 2 grid blocks so both TensorCores stream.
    if rows > align and pl.cdiv(rows, block_rows) < 2:
        half = pl.cdiv(pl.cdiv(rows, 2), align) * align
        block_rows = min(block_rows, half)

    n = rows * lanes
    cost = pl.CostEstimate(flops=3 * n,
                           transcendentals=0,
                           bytes_accessed=2 * n * itemsize)

    return pl.pallas_call(
        functools.partial(_kernel, a_value=a_value),
        out_shape=jax.ShapeDtypeStruct((rows, lanes), dtype),
        grid=(pl.cdiv(rows, block_rows),),
        in_specs=[pl.BlockSpec((block_rows, lanes), lambda i: (i, 0))],
        out_specs=pl.BlockSpec((block_rows, lanes), lambda i: (i, 0)),
        compiler_params=pltpu.CompilerParams(
            dimension_semantics=("parallel",),
            vmem_limit_bytes=_VMEM_LIMIT_BYTES),
        cost_estimate=cost,
    )(x2d)


def leaky_relu6(x: jax.Array, a_value: float = 0.001) -> jax.Array:
    """out = min(6, max(a*x, x)); `a_value` must be a static Python float."""
    orig_shape = x.shape
    dtype = x.dtype
    n = x.size

    if n == 0:
        return x

    # Small-tensor fast path: pure jnp (XLA fuses it; no custom-call overhead).
    if n * jnp.dtype(dtype).itemsize < _SMALL_BYTES:
        return _jnp_leaky_relu6(x, a_value)

    # Aligned path: widest lane width that divides n -> zero padding.  The row
    # count may be ragged w.r.t. the sublane packing; the partial final
    # row-block is handled by Pallas with a masked store.
    for lanes in _LANE_CANDIDATES:
        if n % lanes == 0:
            x2d = jnp.reshape(x, (n // lanes, lanes))
            out2d = _pallas_2d(x2d, a_value)
            return jnp.reshape(out2d, orig_shape)

    # Ragged path (n % 128 != 0, rare): pad only to the next multiple of 128.
    # TODO(synk): a manual-DMA kernel could avoid the pad/slice HBM round trip
    # entirely for very large ragged tensors.
    lanes = 128
    n_pad = pl.cdiv(n, lanes) * lanes
    x_flat = jnp.pad(jnp.reshape(x, (-1,)), (0, n_pad - n))
    out2d = _pallas_2d(jnp.reshape(x_flat, (n_pad // lanes, lanes)), a_value)
    out_flat = jnp.reshape(out2d, (-1,))[:n]
    return jnp.reshape(out_flat, orig_shape)


if __name__ == "__main__":
    key = jax.random.PRNGKey(0)
    k1, k2, k3, k4 = jax.random.split(key, 4)
    a_value = 0.001

    # 1) Small NCHW activation (module's typical use) -> jnp fast path.
    x_small = jax.random.normal(k1, (2, 4, 16, 16), dtype=jnp.float32) * 10.0
    out_small = jax.block_until_ready(leaky_relu6(x_small, a_value))
    ref_small = _jnp_leaky_relu6(x_small, a_value)
    assert out_small.shape == x_small.shape and out_small.dtype == x_small.dtype
    assert jnp.allclose(out_small, ref_small, atol=1e-6, rtol=1e-6)

    # 2) Larger aligned f32 tensor -> Pallas path (lane-dense, no padding).
    x_big = jax.random.normal(k2, (4, 32, 64, 64), dtype=jnp.float32) * 10.0
    out_big = jax.block_until_ready(leaky_relu6(x_big, a_value))
    ref_big = _jnp_leaky_relu6(x_big, a_value)
    assert out_big.shape == x_big.shape and out_big.dtype == x_big.dtype
    assert jnp.allclose(out_big, ref_big, atol=1e-6, rtol=1e-6)

    # 3) Ragged element count (not a multiple of 128) -> Pallas pad-to-128 path.
    x_rag = jax.random.normal(k3, (5, 7, 93, 131), dtype=jnp.float32) * 10.0
    out_rag = jax.block_until_ready(leaky_relu6(x_rag, a_value))
    ref_rag = _jnp_leaky_relu6(x_rag, a_value)
    assert out_rag.shape == x_rag.shape and out_rag.dtype == x_rag.dtype
    assert jnp.allclose(out_rag, ref_rag, atol=1e-6, rtol=1e-6)

    # 4) bf16 tensor -> dtype-aware (16-row) sublane alignment path.
    x_bf16 = (jax.random.normal(k4, (8, 16, 64, 128), dtype=jnp.float32) * 10.0
              ).astype(jnp.bfloat16)
    out_bf16 = jax.block_until_ready(leaky_relu6(x_bf16, a_value))
    ref_bf16 = _jnp_leaky_relu6(x_bf16, a_value)
    assert out_bf16.shape == x_bf16.shape and out_bf16.dtype == x_bf16.dtype
    assert jnp.allclose(out_bf16.astype(jnp.float32),
                        ref_bf16.astype(jnp.float32), atol=1e-2, rtol=1e-2)

    print("KERNEL_OK")
</pallas_src>

<mosaic_0001>
module attributes {stable_mosaic.version = 11 : i64} {
  func.func @_kernel(%arg0: i32, %arg1: memref<128x2048xf32, #tpu.memory_space<vmem>>, %arg2: memref<128x2048xf32, #tpu.memory_space<vmem>>) attributes {dimension_semantics = [#tpu.dimension_semantics<parallel>], iteration_bounds = array<i64: 2>, scalar_prefetch = 0 : i64, scratch_operands = 0 : i64, tpu.core_type = #tpu.core_type<tc>, window_params = [{transform_indices = @transform_0, window_bounds = array<i64: 128, 2048>}, {transform_indices = @transform_1, window_bounds = array<i64: 128, 2048>}]} {
    %c0 = arith.constant 0 : index
    %c0_0 = arith.constant 0 : index
    %0 = vector.load %arg1[%c0, %c0_0] : memref<128x2048xf32, #tpu.memory_space<vmem>>, vector<128x2048xf32>
    %cst = arith.constant 1.000000e-03 : f32
    %1 = vector.broadcast %cst : f32 to vector<128x2048xf32>
    %2 = arith.mulf %1, %0 : vector<128x2048xf32>
    %3 = arith.maximumf %2, %0 : vector<128x2048xf32>
    %cst_1 = arith.constant 6.000000e+00 : f32
    %4 = vector.broadcast %cst_1 : f32 to vector<128x2048xf32>
    %5 = arith.minimumf %4, %3 : vector<128x2048xf32>
    %c0_2 = arith.constant 0 : index
    %c0_3 = arith.constant 0 : index
    %6 = vector.load %arg2[%c0_2, %c0_3] : memref<128x2048xf32, #tpu.memory_space<vmem>>, vector<128x2048xf32>
    tpu.vector_store %arg2[%c0_2, %c0_3], %5 {strides = array<i32>} : memref<128x2048xf32, #tpu.memory_space<vmem>>, vector<128x2048xf32>,
    return
  }
  func.func @transform_0(%arg0: i32) -> (i32, i32) {
    %c0_i32 = arith.constant 0 : i32
    %c0_i32_0 = arith.constant 0 : i32
    return %arg0, %c0_i32 : i32, i32
  }
  func.func @transform_1(%arg0: i32) -> (i32, i32) {
    %c0_i32 = arith.constant 0 : i32
    %c0_i32_0 = arith.constant 0 : i32
    return %arg0, %c0_i32 : i32, i32
  }
}

</mosaic_0001>

<llo_original>
// kernel: tpu_custom_call.1
$region0: #{tpu_custom_call.1}
  #allocation0 [shape = 'u32[]', space=smem, size = 0x4, offset = 0x4, fixed_abs, tag = 'smem constant byte address 0x4 - core index']
  #allocation1 [shape = 'u32[144,128]{1,0:T(1,128)}', space=vmem, size = 0x12000, scoped, tag = 'internal scratch']
  %s0 = inlined_call_operand.hbm [shape: f32[256,2048], index: 0, kind: input, shape index: {}]
  %s1 = inlined_call_operand.hbm [shape: f32[256,2048], index: 1, kind: output, shape index: {}]
  %s2 = sld [smem:[#allocation0]]
  $region41: #{tpu_custom_call.1} parent=0
    _
  %s4 = ssub.s32 1, %s2
  %s5 = scalar_select 0, %s4, %s2
  $region1: #{tpu_custom_call.1} parent=0
    #allocation2 [shape = 'u8[2097152]{0}', space=vmem, size = 0x200000, scoped, tag = 'input window, operand 0']
    #allocation3 [shape = 's32[2]{0}', space=sflag, size = 0x8, scoped, tag = 'scoped memory for tpu_custom_call.1']
    #allocation4 [shape = 's32[2]{0}', space=sflag, size = 0x8, scoped, tag = 'scoped memory for tpu_custom_call.1']
    #allocation5 [shape = 'u8[2097152]{0}', space=vmem, size = 0x200000, scoped, tag = 'output window, operand 0']
    %6 = vsyncpa [#allocation3], 0
    %s7 = scalar_lea.sflag [#allocation3], 1
    %8 = vsyncpa %s7, 0
    %9 = vsyncpa [#allocation4], 0
    %s10 = scalar_lea.sflag [#allocation4], 1
    %11 = vsyncpa %s10, 0
    loop: start=0, step=1, limit=4
    $region2: #{tpu_custom_call.1} parent=1 // loop_pre_header
      _
    $region3: #{tpu_custom_call.1} parent=1 // loop_header
      %s13 = sphi 0, %s17
      %p14 = scmp.ge.s32.totalorder %s13, 4
      %s23 = sphi 0, %s25
      %s26 = sphi 0, %s23
      %s27 = sphi 0, %s26
      %s43 = sphi 0, %s27
      %s49 = sphi 0, %s51
      %s52 = sphi 0, %s49
      %s53 = sphi 0, %s52
      %s69 = sphi 0, %s53
    $region4: #{tpu_custom_call.1} parent=1 // loop_header_branch
      %16 = sbr.rel (%p14) target = $region8
    $region5: #{tpu_custom_call.1} parent=1 // loop_body
      %s18 = ssub.s32 %s13, 1
      %s19 = ssub.s32 %s13, 2
      %s20 = sadd.s32 %s13, 1
      %s21 = ssub.s32 %s13, %s20
      %p22 = scmp.eq.s32.totalorder %s21, 0
      %s24 = sadd.s32 %s23, 1
      %s25 = scalar_select %p22, %s23, %s24
      %p28 = pneg %p22
      %p29 = scmp.eq.s32.totalorder %s13, 1
      %p30 = por %p28, %p29
      %p31 = scmp.ne.s32.totalorder %s23, %s26
      %p32 = scmp.eq.s32.totalorder %s13, 0
      %p33 = por %p31, %p32
      %p34 = scmp.ne.s32.totalorder %s23, %s26
      %p35 = scmp.eq.s32.totalorder %s18, 1
      %p36 = por %p34, %p35
      %p37 = scmp.ne.s32.totalorder %s26, %s27
      %p38 = scmp.eq.s32.totalorder %s18, 0
      %p39 = por %p37, %p38
      %p40 = scmp.ne.s32.totalorder %s26, %s27
      %p41 = scmp.eq.s32.totalorder %s19, 1
      %p42 = por %p40, %p41
      %p44 = scmp.ne.s32.totalorder %s27, %s43
      %p45 = scmp.eq.s32.totalorder %s19, 0
      %p46 = por %p44, %p45
      %s47 = ssub.s32 %s13, %s20
      %p48 = scmp.eq.s32.totalorder %s47, 0
      %s50 = sadd.s32 %s49, 1
      %s51 = scalar_select %p48, %s49, %s50
      %p54 = pneg %p48
      %p55 = scmp.eq.s32.totalorder %s13, 1
      %p56 = por %p54, %p55
      %p57 = scmp.ne.s32.totalorder %s49, %s52
      %p58 = scmp.eq.s32.totalorder %s13, 0
      %p59 = por %p57, %p58
      %p60 = scmp.ne.s32.totalorder %s49, %s52
      %p61 = scmp.eq.s32.totalorder %s18, 1
      %p62 = por %p60, %p61
      %p63 = scmp.ne.s32.totalorder %s52, %s53
      %p64 = scmp.eq.s32.totalorder %s18, 0
      %p65 = por %p63, %p64
      %p66 = scmp.ne.s32.totalorder %s52, %s53
      %p67 = scmp.eq.s32.totalorder %s19, 1
      %p68 = por %p66, %p67
      %p70 = scmp.ne.s32.totalorder %s53, %s69
      %p71 = scmp.eq.s32.totalorder %s19, 0
      %p72 = por %p70, %p71
      %p73 = scmp.le.s32.totalorder 1, %s13
      %p74 = scmp.lt.s32.totalorder %s13, 3
      %p75 = pnand %p73, %p74
      %p76 = pneg %p75
      // Predicated region
      $region9: #{tpu_custom_call.1} parent=5 // pred_check
        _
      $region10: #{tpu_custom_call.1} parent=5 // pred_check_branch
        %78 = sbr.rel (%p75) target = $region12
      $region11: #{tpu_custom_call.1} parent=5 // pred_region
        %s79 = ssub.s32 %s13, 1
      $region12: #{tpu_custom_call.1} parent=5 // pred_fallthru
        _
      %p80 = scmp.lt.s32.totalorder %s13, 2
      // Predicated region
      $region13: #{tpu_custom_call.1} parent=5 // pred_check
        %p81 = pneg %p80
      $region14: #{tpu_custom_call.1} parent=5 // pred_check_branch
        %83 = sbr.rel (%p81) target = $region16
      $region15: #{tpu_custom_call.1} parent=5 // pred_region
        // Predicated region
        $region17: #{tpu_custom_call.1} parent=15 // pred_check
          %p84 = pneg %p33
        $region18: #{tpu_custom_call.1} parent=15 // pred_check_branch
          %86 = sbr.rel (%p84) target = $region20
        $region19: #{tpu_custom_call.1} parent=15 // pred_region
          %s87 = sand.u32 %s23, 1
          %s88 = scalar_lea.sflag [#allocation3], %s87
          %s89 = sand.u32 %s23, 1
          %s90 = smul.addr %s89, 2048
          %s91 = scalar_lea.vmem [#allocation2], %s90
          %s92 = smul.u32 16, %s13
          %s94 = ssub.s32 32768, 32768
          %95 = vsyncadd %s88, %s94
          %s96 = smul.addr %s92, 16
          %s97 = smul.addr %s96, 128
          %s98 = scalar_lea.hbm %s0, %s97
          %s99 = sshll.u32 %s91, 4
          %s100 = int_to_ptr.vmem [resolvable:$true] %s99
          %105 = dma.hbm_to_vmem [thread:$0]  %s98, 32768, %s100, %s88, 2048, 2048, 128
        $region20: #{tpu_custom_call.1} parent=15 // pred_fallthru
          _
      $region16: #{tpu_custom_call.1} parent=5 // pred_fallthru
        _
      %p106 = scmp.le.s32.totalorder 1, %s13
      %p107 = scmp.lt.s32.totalorder %s13, 3
      %p108 = pnand %p106, %p107
      %p109 = pneg %p108
      // Predicated region
      $region21: #{tpu_custom_call.1} parent=5 // pred_check
        _
      $region22: #{tpu_custom_call.1} parent=5 // pred_check_branch
        %111 = sbr.rel (%p108) target = $region24
      $region23: #{tpu_custom_call.1} parent=5 // pred_region
        %s112 = ssub.s32 %s13, 1
        %s113 = sand.u32 %s26, 1
        %s114 = scalar_lea.sflag [#allocation3], %s113
        %s115 = sand.u32 %s26, 1
        %s116 = smul.addr %s115, 2048
        %s117 = scalar_lea.vmem [#allocation2], %s116
        // Predicated region
        $region25: #{tpu_custom_call.1} parent=23 // pred_check
          %p118 = pneg %p39
        $region26: #{tpu_custom_call.1} parent=23 // pred_check_branch
          %120 = sbr.rel (%p118) target = $region28
        $region27: #{tpu_custom_call.1} parent=23 // pred_region
          %121 = dma.done %s114, 32768
        $region28: #{tpu_custom_call.1} parent=23 // pred_fallthru
          _
        %s122 = sand.u32 %s26, 1
        %s123 = scalar_lea.sflag [#allocation3], %s122
        %s124 = sand.u32 %s26, 1
        %s125 = smul.addr %s124, 2048
        %s126 = scalar_lea.vmem [#allocation2], %s125
        %p127 = pneg %p39
        %p128 = pneg %p36
        %p129 = pneg %p65
        %p130 = pneg %p62
        %s131 = sand.u32 %s52, 1
        %s132 = scalar_lea.sflag [#allocation4], %s131
        %s133 = sand.u32 %s52, 1
        %s134 = smul.addr %s133, 2048
        %s135 = scalar_lea.vmem [#allocation5], %s134
        %s136 = smul.u32 16, %s18
        %s137 = smul.u32 16, %s18
        %v138 = vld [vmem:[%s117] sm:$0xff]
        %v139 = vld [vmem:[%s117 + $0x8] sm:$0xff]
        %v140 = vld [vmem:[%s117 + $0x10] sm:$0xff]
        %v141 = vld [vmem:[%s117 + $0x18] sm:$0xff]
        %v142 = vld [vmem:[%s117 + $0x20] sm:$0xff]
        %v143 = vld [vmem:[%s117 + $0x28] sm:$0xff]
        %v144 = vld [vmem:[%s117 + $0x30] sm:$0xff]
        %v145 = vld [vmem:[%s117 + $0x38] sm:$0xff]
        %v146 = vld [vmem:[%s117 + $0x40] sm:$0xff]
        %v147 = vld [vmem:[%s117 + $0x48] sm:$0xff]
        %v148 = vld [vmem:[%s117 + $0x50] sm:$0xff]
        %v149 = vld [vmem:[%s117 + $0x58] sm:$0xff]
        %v150 = vld [vmem:[%s117 + $0x60] sm:$0xff]
        %v151 = vld [vmem:[%s117 + $0x68] sm:$0xff]
        %v152 = vld [vmem:[%s117 + $0x70] sm:$0xff]
        %v153 = vld [vmem:[%s117 + $0x78] sm:$0xff]
        %v154 = vld [vmem:[%s117 + $0x80] sm:$0xff]
        %v155 = vld [vmem:[%s117 + $0x88] sm:$0xff]
        %v156 = vld [vmem:[%s117 + $0x90] sm:$0xff]
        %v157 = vld [vmem:[%s117 + $0x98] sm:$0xff]
        %v158 = vld [vmem:[%s117 + $0xa0] sm:$0xff]
        %v159 = vld [vmem:[%s117 + $0xa8] sm:$0xff]
        %v160 = vld [vmem:[%s117 + $0xb0] sm:$0xff]
        %v161 = vld [vmem:[%s117 + $0xb8] sm:$0xff]
        %v162 = vld [vmem:[%s117 + $0xc0] sm:$0xff]
        %v163 = vld [vmem:[%s117 + $0xc8] sm:$0xff]
        %v164 = vld [vmem:[%s117 + $0xd0] sm:$0xff]
        %v165 = vld [vmem:[%s117 + $0xd8] sm:$0xff]
        %v166 = vld [vmem:[%s117 + $0xe0] sm:$0xff]
        %v167 = vld [vmem:[%s117 + $0xe8] sm:$0xff]
        %v168 = vld [vmem:[%s117 + $0xf0] sm:$0xff]
        %v169 = vld [vmem:[%s117 + $0xf8] sm:$0xff]
        %v170 = vld [vmem:[%s117 + $0x100] sm:$0xff]
        %v171 = vld [vmem:[%s117 + $0x108] sm:$0xff]
        %v172 = vld [vmem:[%s117 + $0x110] sm:$0xff]
        %v173 = vld [vmem:[%s117 + $0x118] sm:$0xff]
        %v174 = vld [vmem:[%s117 + $0x120] sm:$0xff]
        %v175 = vld [vmem:[%s117 + $0x128] sm:$0xff]
        %v176 = vld [vmem:[%s117 + $0x130] sm:$0xff]
        %v177 = vld [vmem:[%s117 + $0x138] sm:$0xff]
        %v178 = vld [vmem:[%s117 + $0x140] sm:$0xff]
        %v179 = vld [vmem:[%s117 + $0x148] sm:$0xff]
        %v180 = vld [vmem:[%s117 + $0x150] sm:$0xff]
        %v181 = vld [vmem:[%s117 + $0x158] sm:$0xff]
        %v182 = vld [vmem:[%s117 + $0x160] sm:$0xff]
        %v183 = vld [vmem:[%s117 + $0x168] sm:$0xff]
        %v184 = vld [vmem:[%s117 + $0x170] sm:$0xff]
        %v185 = vld [vmem:[%s117 + $0x178] sm:$0xff]
        %v186 = vld [vmem:[%s117 + $0x180] sm:$0xff]
        %v187 = vld [vmem:[%s117 + $0x188] sm:$0xff]
        %v188 = vld [vmem:[%s117 + $0x190] sm:$0xff]
        %v189 = vld [vmem:[%s117 + $0x198] sm:$0xff]
        %v190 = vld [vmem:[%s117 + $0x1a0] sm:$0xff]
        %v191 = vld [vmem:[%s117 + $0x1a8] sm:$0xff]
        %v192 = vld [vmem:[%s117 + $0x1b0] sm:$0xff]
        %v193 = vld [vmem:[%s117 + $0x1b8] sm:$0xff]
        %v194 = vld [vmem:[%s117 + $0x1c0] sm:$0xff]
        %v195 = vld [vmem:[%s117 + $0x1c8] sm:$0xff]
        %v196 = vld [vmem:[%s117 + $0x1d0] sm:$0xff]
        %v197 = vld [vmem:[%s117 + $0x1d8] sm:$0xff]
        %v198 = vld [vmem:[%s117 + $0x1e0] sm:$0xff]
        %v199 = vld [vmem:[%s117 + $0x1e8] sm:$0xff]
        %v200 = vld [vmem:[%s117 + $0x1f0] sm:$0xff]
        %v201 = vld [vmem:[%s117 + $0x1f8] sm:$0xff]
        %v202 = vld [vmem:[%s117 + $0x200] sm:$0xff]
        %v203 = vld [vmem:[%s117 + $0x208] sm:$0xff]
        %v204 = vld [vmem:[%s117 + $0x210] sm:$0xff]
        %v205 = vld [vmem:[%s117 + $0x218] sm:$0xff]
        %v206 = vld [vmem:[%s117 + $0x220] sm:$0xff]
        %v207 = vld [vmem:[%s117 + $0x228] sm:$0xff]
        %v208 = vld [vmem:[%s117 + $0x230] sm:$0xff]
        %v209 = vld [vmem:[%s117 + $0x238] sm:$0xff]
        %v210 = vld [vmem:[%s117 + $0x240] sm:$0xff]
        %v211 = vld [vmem:[%s117 + $0x248] sm:$0xff]
        %v212 = vld [vmem:[%s117 + $0x250] sm:$0xff]
        %v213 = vld [vmem:[%s117 + $0x258] sm:$0xff]
        %v214 = vld [vmem:[%s117 + $0x260] sm:$0xff]
        %v215 = vld [vmem:[%s117 + $0x268] sm:$0xff]
        %v216 = vld [vmem:[%s117 + $0x270] sm:$0xff]
        %v217 = vld [vmem:[%s117 + $0x278] sm:$0xff]
        %v218 = vld [vmem:[%s117 + $0x280] sm:$0xff]
        %v219 = vld [vmem:[%s117 + $0x288] sm:$0xff]
        %v220 = vld [vmem:[%s117 + $0x290] sm:$0xff]
        %v221 = vld [vmem:[%s117 + $0x298] sm:$0xff]
        %v222 = vld [vmem:[%s117 + $0x2a0] sm:$0xff]
        %v223 = vld [vmem:[%s117 + $0x2a8] sm:$0xff]
        %v224 = vld [vmem:[%s117 + $0x2b0] sm:$0xff]
        %v225 = vld [vmem:[%s117 + $0x2b8] sm:$0xff]
        %v226 = vld [vmem:[%s117 + $0x2c0] sm:$0xff]
        %v227 = vld [vmem:[%s117 + $0x2c8] sm:$0xff]
        %v228 = vld [vmem:[%s117 + $0x2d0] sm:$0xff]
        %v229 = vld [vmem:[%s117 + $0x2d8] sm:$0xff]
        %v230 = vld [vmem:[%s117 + $0x2e0] sm:$0xff]
        %v231 = vld [vmem:[%s117 + $0x2e8] sm:$0xff]
        %v232 = vld [vmem:[%s117 + $0x2f0] sm:$0xff]
        %v233 = vld [vmem:[%s117 + $0x2f8] sm:$0xff]
        %v234 = vld [vmem:[%s117 + $0x300] sm:$0xff]
        %v235 = vld [vmem:[%s117 + $0x308] sm:$0xff]
        %v236 = vld [vmem:[%s117 + $0x310] sm:$0xff]
        %v237 = vld [vmem:[%s117 + $0x318] sm:$0xff]
        %v238 = vld [vmem:[%s117 + $0x320] sm:$0xff]
        %v239 = vld [vmem:[%s117 + $0x328] sm:$0xff]
        %v240 = vld [vmem:[%s117 + $0x330] sm:$0xff]
        %v241 = vld [vmem:[%s117 + $0x338] sm:$0xff]
        %v242 = vld [vmem:[%s117 + $0x340] sm:$0xff]
        %v243 = vld [vmem:[%s117 + $0x348] sm:$0xff]
        %v244 = vld [vmem:[%s117 + $0x350] sm:$0xff]
        %v245 = vld [vmem:[%s117 + $0x358] sm:$0xff]
        %v246 = vld [vmem:[%s117 + $0x360] sm:$0xff]
        %v247 = vld [vmem:[%s117 + $0x368] sm:$0xff]
        %v248 = vld [vmem:[%s117 + $0x370] sm:$0xff]
        %v249 = vld [vmem:[%s117 + $0x378] sm:$0xff]
        %v250 = vld [vmem:[%s117 + $0x380] sm:$0xff]
        %v251 = vld [vmem:[%s117 + $0x388] sm:$0xff]
        %v252 = vld [vmem:[%s117 + $0x390] sm:$0xff]
        %v253 = vld [vmem:[%s117 + $0x398] sm:$0xff]
        %v254 = vld [vmem:[%s117 + $0x3a0] sm:$0xff]
        %v255 = vld [vmem:[%s117 + $0x3a8] sm:$0xff]
        %v256 = vld [vmem:[%s117 + $0x3b0] sm:$0xff]
        %v257 = vld [vmem:[%s117 + $0x3b8] sm:$0xff]
        %v258 = vld [vmem:[%s117 + $0x3c0] sm:$0xff]
        %v259 = vld [vmem:[%s117 + $0x3c8] sm:$0xff]
        %v260 = vld [vmem:[%s117 + $0x3d0] sm:$0xff]
        %v261 = vld [vmem:[%s117 + $0x3d8] sm:$0xff]
        %v262 = vld [vmem:[%s117 + $0x3e0] sm:$0xff]
        %v263 = vld [vmem:[%s117 + $0x3e8] sm:$0xff]
        %v264 = vld [vmem:[%s117 + $0x3f0] sm:$0xff]
        %v265 = vld [vmem:[%s117 + $0x3f8] sm:$0xff]
        %v266 = vld [vmem:[%s117 + $0x400] sm:$0xff]
        %v267 = vld [vmem:[%s117 + $0x408] sm:$0xff]
        %v268 = vld [vmem:[%s117 + $0x410] sm:$0xff]
        %v269 = vld [vmem:[%s117 + $0x418] sm:$0xff]
        %v270 = vld [vmem:[%s117 + $0x420] sm:$0xff]
        %v271 = vld [vmem:[%s117 + $0x428] sm:$0xff]
        %v272 = vld [vmem:[%s117 + $0x430] sm:$0xff]
        %v273 = vld [vmem:[%s117 + $0x438] sm:$0xff]
        %v274 = vld [vmem:[%s117 + $0x440] sm:$0xff]
        %v275 = vld [vmem:[%s117 + $0x448] sm:$0xff]
        %v276 = vld [vmem:[%s117 + $0x450] sm:$0xff]
        %v277 = vld [vmem:[%s117 + $0x458] sm:$0xff]
        %v278 = vld [vmem:[%s117 + $0x460] sm:$0xff]
        %v279 = vld [vmem:[%s117 + $0x468] sm:$0xff]
        %v280 = vld [vmem:[%s117 + $0x470] sm:$0xff]
        %v281 = vld [vmem:[%s117 + $0x478] sm:$0xff]
        %v282 = vld [vmem:[%s117 + $0x480] sm:$0xff]
        %v283 = vld [vmem:[%s117 + $0x488] sm:$0xff]
        %v284 = vld [vmem:[%s117 + $0x490] sm:$0xff]
        %v285 = vld [vmem:[%s117 + $0x498] sm:$0xff]
        %v286 = vld [vmem:[%s117 + $0x4a0] sm:$0xff]
        %v287 = vld [vmem:[%s117 + $0x4a8] sm:$0xff]
        %v288 = vld [vmem:[%s117 + $0x4b0] sm:$0xff]
        %v289 = vld [vmem:[%s117 + $0x4b8] sm:$0xff]
        %v290 = vld [vmem:[%s117 + $0x4c0] sm:$0xff]
        %v291 = vld [vmem:[%s117 + $0x4c8] sm:$0xff]
        %v292 = vld [vmem:[%s117 + $0x4d0] sm:$0xff]
        %v293 = vld [vmem:[%s117 + $0x4d8] sm:$0xff]
        %v294 = vld [vmem:[%s117 + $0x4e0] sm:$0xff]
        %v295 = vld [vmem:[%s117 + $0x4e8] sm:$0xff]
        %v296 = vld [vmem:[%s117 + $0x4f0] sm:$0xff]
        %v297 = vld [vmem:[%s117 + $0x4f8] sm:$0xff]
        %v298 = vld [vmem:[%s117 + $0x500] sm:$0xff]
        %v299 = vld [vmem:[%s117 + $0x508] sm:$0xff]
        %v300 = vld [vmem:[%s117 + $0x510] sm:$0xff]
        %v301 = vld [vmem:[%s117 + $0x518] sm:$0xff]
        %v302 = vld [vmem:[%s117 + $0x520] sm:$0xff]
        %v303 = vld [vmem:[%s117 + $0x528] sm:$0xff]
        %v304 = vld [vmem:[%s117 + $0x530] sm:$0xff]
        %v305 = vld [vmem:[%s117 + $0x538] sm:$0xff]
        %v306 = vld [vmem:[%s117 + $0x540] sm:$0xff]
        %v307 = vld [vmem:[%s117 + $0x548] sm:$0xff]
        %v308 = vld [vmem:[%s117 + $0x550] sm:$0xff]
        %v309 = vld [vmem:[%s117 + $0x558] sm:$0xff]
        %v310 = vld [vmem:[%s117 + $0x560] sm:$0xff]
        %v311 = vld [vmem:[%s117 + $0x568] sm:$0xff]
        %v312 = vld [vmem:[%s117 + $0x570] sm:$0xff]
        %v313 = vld [vmem:[%s117 + $0x578] sm:$0xff]
        %v314 = vld [vmem:[%s117 + $0x580] sm:$0xff]
        %v315 = vld [vmem:[%s117 + $0x588] sm:$0xff]
        %v316 = vld [vmem:[%s117 + $0x590] sm:$0xff]
        %v317 = vld [vmem:[%s117 + $0x598] sm:$0xff]
        %v318 = vld [vmem:[%s117 + $0x5a0] sm:$0xff]
        %v319 = vld [vmem:[%s117 + $0x5a8] sm:$0xff]
        %v320 = vld [vmem:[%s117 + $0x5b0] sm:$0xff]
        %v321 = vld [vmem:[%s117 + $0x5b8] sm:$0xff]
        %v322 = vld [vmem:[%s117 + $0x5c0] sm:$0xff]
        %v323 = vld [vmem:[%s117 + $0x5c8] sm:$0xff]
        %v324 = vld [vmem:[%s117 + $0x5d0] sm:$0xff]
        %v325 = vld [vmem:[%s117 + $0x5d8] sm:$0xff]
        %v326 = vld [vmem:[%s117 + $0x5e0] sm:$0xff]
        %v327 = vld [vmem:[%s117 + $0x5e8] sm:$0xff]
        %v328 = vld [vmem:[%s117 + $0x5f0] sm:$0xff]
        %v329 = vld [vmem:[%s117 + $0x5f8] sm:$0xff]
        %v330 = vld [vmem:[%s117 + $0x600] sm:$0xff]
        %v331 = vld [vmem:[%s117 + $0x608] sm:$0xff]
        %v332 = vld [vmem:[%s117 + $0x610] sm:$0xff]
        %v333 = vld [vmem:[%s117 + $0x618] sm:$0xff]
        %v334 = vld [vmem:[%s117 + $0x620] sm:$0xff]
        %v335 = vld [vmem:[%s117 + $0x628] sm:$0xff]
        %v336 = vld [vmem:[%s117 + $0x630] sm:$0xff]
        %v337 = vld [vmem:[%s117 + $0x638] sm:$0xff]
        %v338 = vld [vmem:[%s117 + $0x640] sm:$0xff]
        %v339 = vld [vmem:[%s117 + $0x648] sm:$0xff]
        %v340 = vld [vmem:[%s117 + $0x650] sm:$0xff]
        %v341 = vld [vmem:[%s117 + $0x658] sm:$0xff]
        %v342 = vld [vmem:[%s117 + $0x660] sm:$0xff]
        %v343 = vld [vmem:[%s117 + $0x668] sm:$0xff]
        %v344 = vld [vmem:[%s117 + $0x670] sm:$0xff]
        %v345 = vld [vmem:[%s117 + $0x678] sm:$0xff]
        %v346 = vld [vmem:[%s117 + $0x680] sm:$0xff]
        %v347 = vld [vmem:[%s117 + $0x688] sm:$0xff]
        %v348 = vld [vmem:[%s117 + $0x690] sm:$0xff]
        %v349 = vld [vmem:[%s117 + $0x698] sm:$0xff]
        %v350 = vld [vmem:[%s117 + $0x6a0] sm:$0xff]
        %v351 = vld [vmem:[%s117 + $0x6a8] sm:$0xff]
        %v352 = vld [vmem:[%s117 + $0x6b0] sm:$0xff]
        %v353 = vld [vmem:[%s117 + $0x6b8] sm:$0xff]
        %v354 = vld [vmem:[%s117 + $0x6c0] sm:$0xff]
        %v355 = vld [vmem:[%s117 + $0x6c8] sm:$0xff]
        %v356 = vld [vmem:[%s117 + $0x6d0] sm:$0xff]
        %v357 = vld [vmem:[%s117 + $0x6d8] sm:$0xff]
        %v358 = vld [vmem:[%s117 + $0x6e0] sm:$0xff]
        %v359 = vld [vmem:[%s117 + $0x6e8] sm:$0xff]
        %v360 = vld [vmem:[%s117 + $0x6f0] sm:$0xff]
        %v361 = vld [vmem:[%s117 + $0x6f8] sm:$0xff]
        %v362 = vld [vmem:[%s117 + $0x700] sm:$0xff]
        %v363 = vld [vmem:[%s117 + $0x708] sm:$0xff]
        %v364 = vld [vmem:[%s117 + $0x710] sm:$0xff]
        %v365 = vld [vmem:[%s117 + $0x718] sm:$0xff]
        %v366 = vld [vmem:[%s117 + $0x720] sm:$0xff]
        %v367 = vld [vmem:[%s117 + $0x728] sm:$0xff]
        %v368 = vld [vmem:[%s117 + $0x730] sm:$0xff]
        %v369 = vld [vmem:[%s117 + $0x738] sm:$0xff]
        %v370 = vld [vmem:[%s117 + $0x740] sm:$0xff]
        %v371 = vld [vmem:[%s117 + $0x748] sm:$0xff]
        %v372 = vld [vmem:[%s117 + $0x750] sm:$0xff]
        %v373 = vld [vmem:[%s117 + $0x758] sm:$0xff]
        %v374 = vld [vmem:[%s117 + $0x760] sm:$0xff]
        %v375 = vld [vmem:[%s117 + $0x768] sm:$0xff]
        %v376 = vld [vmem:[%s117 + $0x770] sm:$0xff]
        %v377 = vld [vmem:[%s117 + $0x778] sm:$0xff]
        %v378 = vld [vmem:[%s117 + $0x780] sm:$0xff]
        %v379 = vld [vmem:[%s117 + $0x788] sm:$0xff]
        %v380 = vld [vmem:[%s117 + $0x790] sm:$0xff]
        %v381 = vld [vmem:[%s117 + $0x798] sm:$0xff]
        %v382 = vld [vmem:[%s117 + $0x7a0] sm:$0xff]
        %v383 = vld [vmem:[%s117 + $0x7a8] sm:$0xff]
        %v384 = vld [vmem:[%s117 + $0x7b0] sm:$0xff]
        %v385 = vld [vmem:[%s117 + $0x7b8] sm:$0xff]
        %v386 = vld [vmem:[%s117 + $0x7c0] sm:$0xff]
        %v387 = vld [vmem:[%s117 + $0x7c8] sm:$0xff]
        %v388 = vld [vmem:[%s117 + $0x7d0] sm:$0xff]
        %v389 = vld [vmem:[%s117 + $0x7d8] sm:$0xff]
        %v390 = vld [vmem:[%s117 + $0x7e0] sm:$0xff]
        %v391 = vld [vmem:[%s117 + $0x7e8] sm:$0xff]
        %v392 = vld [vmem:[%s117 + $0x7f0] sm:$0xff]
        %v393 = vld [vmem:[%s117 + $0x7f8] sm:$0xff]
        %v394 = vmul.f32 %v138, 0.001
        %v395 = vmul.f32 %v139, 0.001
        %v396 = vmul.f32 %v140, 0.001
        %v397 = vmul.f32 %v141, 0.001
        %v398 = vmul.f32 %v142, 0.001
        %v399 = vmul.f32 %v143, 0.001
        %v400 = vmul.f32 %v144, 0.001
        %v401 = vmul.f32 %v145, 0.001
        %v402 = vmul.f32 %v146, 0.001
        %v403 = vmul.f32 %v147, 0.001
        %v404 = vmul.f32 %v148, 0.001
        %v405 = vmul.f32 %v149, 0.001
        %v406 = vmul.f32 %v150, 0.001
        %v407 = vmul.f32 %v151, 0.001
        %v408 = vmul.f32 %v152, 0.001
        %v409 = vmul.f32 %v153, 0.001
        %v410 = vmul.f32 %v154, 0.001
        %v411 = vmul.f32 %v155, 0.001
        %v412 = vmul.f32 %v156, 0.001
        %v413 = vmul.f32 %v157, 0.001
        %v414 = vmul.f32 %v158, 0.001
        %v415 = vmul.f32 %v159, 0.001
        %v416 = vmul.f32 %v160, 0.001
        %v417 = vmul.f32 %v161, 0.001
        %v418 = vmul.f32 %v162, 0.001
        %v419 = vmul.f32 %v163, 0.001
        %v420 = vmul.f32 %v164, 0.001
        %v421 = vmul.f32 %v165, 0.001
        %v422 = vmul.f32 %v166, 0.001
        %v423 = vmul.f32 %v167, 0.001
        %v424 = vmul.f32 %v168, 0.001
        %v425 = vmul.f32 %v169, 0.001
        %v426 = vmul.f32 %v170, 0.001
        %v427 = vmul.f32 %v171, 0.001
        %v428 = vmul.f32 %v172, 0.001
        %v429 = vmul.f32 %v173, 0.001
        %v430 = vmul.f32 %v174, 0.001
        %v431 = vmul.f32 %v175, 0.001
        %v432 = vmul.f32 %v176, 0.001
        %v433 = vmul.f32 %v177, 0.001
        %v434 = vmul.f32 %v178, 0.001
        %v435 = vmul.f32 %v179, 0.001
        %v436 = vmul.f32 %v180, 0.001
        %v437 = vmul.f32 %v181, 0.001
        %v438 = vmul.f32 %v182, 0.001
        %v439 = vmul.f32 %v183, 0.001
        %v440 = vmul.f32 %v184, 0.001
        %v441 = vmul.f32 %v185, 0.001
        %v442 = vmul.f32 %v186, 0.001
        %v443 = vmul.f32 %v187, 0.001
        %v444 = vmul.f32 %v188, 0.001
        %v445 = vmul.f32 %v189, 0.001
        %v446 = vmul.f32 %v190, 0.001
        %v447 = vmul.f32 %v191, 0.001
        %v448 = vmul.f32 %v192, 0.001
        %v449 = vmul.f32 %v193, 0.001
        %v450 = vmul.f32 %v194, 0.001
        %v451 = vmul.f32 %v195, 0.001
        %v452 = vmul.f32 %v196, 0.001
        %v453 = vmul.f32 %v197, 0.001
        %v454 = vmul.f32 %v198, 0.001
        %v455 = vmul.f32 %v199, 0.001
        %v456 = vmul.f32 %v200, 0.001
        %v457 = vmul.f32 %v201, 0.001
        %v458 = vmul.f32 %v202, 0.001
        %v459 = vmul.f32 %v203, 0.001
        %v460 = vmul.f32 %v204, 0.001
        %v461 = vmul.f32 %v205, 0.001
        %v462 = vmul.f32 %v206, 0.001
        %v463 = vmul.f32 %v207, 0.001
        %v464 = vmul.f32 %v208, 0.001
        %v465 = vmul.f32 %v209, 0.001
        %v466 = vmul.f32 %v210, 0.001
        %v467 = vmul.f32 %v211, 0.001
        %v468 = vmul.f32 %v212, 0.001
        %v469 = vmul.f32 %v213, 0.001
        %v470 = vmul.f32 %v214, 0.001
        %v471 = vmul.f32 %v215, 0.001
        %v472 = vmul.f32 %v216, 0.001
        %v473 = vmul.f32 %v217, 0.001
        %v474 = vmul.f32 %v218, 0.001
        %v475 = vmul.f32 %v219, 0.001
        %v476 = vmul.f32 %v220, 0.001
        %v477 = vmul.f32 %v221, 0.001
        %v478 = vmul.f32 %v222, 0.001
        %v479 = vmul.f32 %v223, 0.001
        %v480 = vmul.f32 %v224, 0.001
        %v481 = vmul.f32 %v225, 0.001
        %v482 = vmul.f32 %v226, 0.001
        %v483 = vmul.f32 %v227, 0.001
        %v484 = vmul.f32 %v228, 0.001
        %v485 = vmul.f32 %v229, 0.001
        %v486 = vmul.f32 %v230, 0.001
        %v487 = vmul.f32 %v231, 0.001
        %v488 = vmul.f32 %v232, 0.001
        %v489 = vmul.f32 %v233, 0.001
        %v490 = vmul.f32 %v234, 0.001
        %v491 = vmul.f32 %v235, 0.001
        %v492 = vmul.f32 %v236, 0.001
        %v493 = vmul.f32 %v237, 0.001
        %v494 = vmul.f32 %v238, 0.001
        %v495 = vmul.f32 %v239, 0.001
        %v496 = vmul.f32 %v240, 0.001
        %v497 = vmul.f32 %v241, 0.001
        %v498 = vmul.f32 %v242, 0.001
        %v499 = vmul.f32 %v243, 0.001
        %v500 = vmul.f32 %v244, 0.001
        %v501 = vmul.f32 %v245, 0.001
        %v502 = vmul.f32 %v246, 0.001
        %v503 = vmul.f32 %v247, 0.001
        %v504 = vmul.f32 %v248, 0.001
        %v505 = vmul.f32 %v249, 0.001
        %v506 = vmul.f32 %v250, 0.001
        %v507 = vmul.f32 %v251, 0.001
        %v508 = vmul.f32 %v252, 0.001
        %v509 = vmul.f32 %v253, 0.001
        %v510 = vmul.f32 %v254, 0.001
        %v511 = vmul.f32 %v255, 0.001
        %v512 = vmul.f32 %v256, 0.001
        %v513 = vmul.f32 %v257, 0.001
        %v514 = vmul.f32 %v258, 0.001
        %v515 = vmul.f32 %v259, 0.001
        %v516 = vmul.f32 %v260, 0.001
        %v517 = vmul.f32 %v261, 0.001
        %v518 = vmul.f32 %v262, 0.001
        %v519 = vmul.f32 %v263, 0.001
        %v520 = vmul.f32 %v264, 0.001
        %v521 = vmul.f32 %v265, 0.001
        %v522 = vmul.f32 %v266, 0.001
        %v523 = vmul.f32 %v267, 0.001
        %v524 = vmul.f32 %v268, 0.001
        %v525 = vmul.f32 %v269, 0.001
        %v526 = vmul.f32 %v270, 0.001
        %v527 = vmul.f32 %v271, 0.001
        %v528 = vmul.f32 %v272, 0.001
        %v529 = vmul.f32 %v273, 0.001
        %v530 = vmul.f32 %v274, 0.001
        %v531 = vmul.f32 %v275, 0.001
        %v532 = vmul.f32 %v276, 0.001
        %v533 = vmul.f32 %v277, 0.001
        %v534 = vmul.f32 %v278, 0.001
        %v535 = vmul.f32 %v279, 0.001
        %v536 = vmul.f32 %v280, 0.001
        %v537 = vmul.f32 %v281, 0.001
        %v538 = vmul.f32 %v282, 0.001
        %v539 = vmul.f32 %v283, 0.001
        %v540 = vmul.f32 %v284, 0.001
        %v541 = vmul.f32 %v285, 0.001
        %v542 = vmul.f32 %v286, 0.001
        %v543 = vmul.f32 %v287, 0.001
        %v544 = vmul.f32 %v288, 0.001
        %v545 = vmul.f32 %v289, 0.001
        %v546 = vmul.f32 %v290, 0.001
        %v547 = vmul.f32 %v291, 0.001
        %v548 = vmul.f32 %v292, 0.001
        %v549 = vmul.f32 %v293, 0.001
        %v550 = vmul.f32 %v294, 0.001
        %v551 = vmul.f32 %v295, 0.001
        %v552 = vmul.f32 %v296, 0.001
        %v553 = vmul.f32 %v297, 0.001
        %v554 = vmul.f32 %v298, 0.001
        %v555 = vmul.f32 %v299, 0.001
        %v556 = vmul.f32 %v300, 0.001
        %v557 = vmul.f32 %v301, 0.001
        %v558 = vmul.f32 %v302, 0.001
        %v559 = vmul.f32 %v303, 0.001
        %v560 = vmul.f32 %v304, 0.001
        %v561 = vmul.f32 %v305, 0.001
        %v562 = vmul.f32 %v306, 0.001
        %v563 = vmul.f32 %v307, 0.001
        %v564 = vmul.f32 %v308, 0.001
        %v565 = vmul.f32 %v309, 0.001
        %v566 = vmul.f32 %v310, 0.001
        %v567 = vmul.f32 %v311, 0.001
        %v568 = vmul.f32 %v312, 0.001
        %v569 = vmul.f32 %v313, 0.001
        %v570 = vmul.f32 %v314, 0.001
        %v571 = vmul.f32 %v315, 0.001
        %v572 = vmul.f32 %v316, 0.001
        %v573 = vmul.f32 %v317, 0.001
        %v574 = vmul.f32 %v318, 0.001
        %v575 = vmul.f32 %v319, 0.001
        %v576 = vmul.f32 %v320, 0.001
        %v577 = vmul.f32 %v321, 0.001
        %v578 = vmul.f32 %v322, 0.001
        %v579 = vmul.f32 %v323, 0.001
        %v580 = vmul.f32 %v324, 0.001
        %v581 = vmul.f32 %v325, 0.001
        %v582 = vmul.f32 %v326, 0.001
        %v583 = vmul.f32 %v327, 0.001
        %v584 = vmul.f32 %v328, 0.001
        %v585 = vmul.f32 %v329, 0.001
        %v586 = vmul.f32 %v330, 0.001
        %v587 = vmul.f32 %v331, 0.001
        %v588 = vmul.f32 %v332, 0.001
        %v589 = vmul.f32 %v333, 0.001
        %v590 = vmul.f32 %v334, 0.001
        %v591 = vmul.f32 %v335, 0.001
        %v592 = vmul.f32 %v336, 0.001
        %v593 = vmul.f32 %v337, 0.001
        %v594 = vmul.f32 %v338, 0.001
        %v595 = vmul.f32 %v339, 0.001
        %v596 = vmul.f32 %v340, 0.001
        %v597 = vmul.f32 %v341, 0.001
        %v598 = vmul.f32 %v342, 0.001
        %v599 = vmul.f32 %v343, 0.001
        %v600 = vmul.f32 %v344, 0.001
        %v601 = vmul.f32 %v345, 0.001
        %v602 = vmul.f32 %v346, 0.001
        %v603 = vmul.f32 %v347, 0.001
        %v604 = vmul.f32 %v348, 0.001
        %v605 = vmul.f32 %v349, 0.001
        %v606 = vmul.f32 %v350, 0.001
        %v607 = vmul.f32 %v351, 0.001
        %v608 = vmul.f32 %v352, 0.001
        %v609 = vmul.f32 %v353, 0.001
        %v610 = vmul.f32 %v354, 0.001
        %v611 = vmul.f32 %v355, 0.001
        %v612 = vmul.f32 %v356, 0.001
        %v613 = vmul.f32 %v357, 0.001
        %v614 = vmul.f32 %v358, 0.001
        %v615 = vmul.f32 %v359, 0.001
        %v616 = vmul.f32 %v360, 0.001
        %v617 = vmul.f32 %v361, 0.001
        %v618 = vmul.f32 %v362, 0.001
        %v619 = vmul.f32 %v363, 0.001
        %v620 = vmul.f32 %v364, 0.001
        %v621 = vmul.f32 %v365, 0.001
        %v622 = vmul.f32 %v366, 0.001
        %v623 = vmul.f32 %v367, 0.001
        %v624 = vmul.f32 %v368, 0.001
        %v625 = vmul.f32 %v369, 0.001
        %v626 = vmul.f32 %v370, 0.001
        %v627 = vmul.f32 %v371, 0.001
        %v628 = vmul.f32 %v372, 0.001
        %v629 = vmul.f32 %v373, 0.001
        %v630 = vmul.f32 %v374, 0.001
        %v631 = vmul.f32 %v375, 0.001
        %v632 = vmul.f32 %v376, 0.001
        %v633 = vmul.f32 %v377, 0.001
        %v634 = vmul.f32 %v378, 0.001
        %v635 = vmul.f32 %v379, 0.001
        %v636 = vmul.f32 %v380, 0.001
        %v637 = vmul.f32 %v381, 0.001
        %v638 = vmul.f32 %v382, 0.001
        %v639 = vmul.f32 %v383, 0.001
        %v640 = vmul.f32 %v384, 0.001
        %v641 = vmul.f32 %v385, 0.001
        %v642 = vmul.f32 %v386, 0.001
        %v643 = vmul.f32 %v387, 0.001
        %v644 = vmul.f32 %v388, 0.001
        %v645 = vmul.f32 %v389, 0.001
        %v646 = vmul.f32 %v390, 0.001
        %v647 = vmul.f32 %v391, 0.001
        %v648 = vmul.f32 %v392, 0.001
        %v649 = vmul.f32 %v393, 0.001
        %v650 = vmax.f32 %v394, %v138
        %v651 = vmax.f32 %v395, %v139
        %v652 = vmax.f32 %v396, %v140
        %v653 = vmax.f32 %v397, %v141
        %v654 = vmax.f32 %v398, %v142
        %v655 = vmax.f32 %v399, %v143
        %v656 = vmax.f32 %v400, %v144
        %v657 = vmax.f32 %v401, %v145
        %v658 = vmax.f32 %v402, %v146
        %v659 = vmax.f32 %v403, %v147
        %v660 = vmax.f32 %v404, %v148
        %v661 = vmax.f32 %v405, %v149
        %v662 = vmax.f32 %v406, %v150
        %v663 = vmax.f32 %v407, %v151
        %v664 = vmax.f32 %v408, %v152
        %v665 = vmax.f32 %v409, %v153
        %v666 = vmax.f32 %v410, %v154
        %v667 = vmax.f32 %v411, %v155
        %v668 = vmax.f32 %v412, %v156
        %v669 = vmax.f32 %v413, %v157
        %v670 = vmax.f32 %v414, %v158
        %v671 = vmax.f32 %v415, %v159
        %v672 = vmax.f32 %v416, %v160
        %v673 = vmax.f32 %v417, %v161
        %v674 = vmax.f32 %v418, %v162
        %v675 = vmax.f32 %v419, %v163
        %v676 = vmax.f32 %v420, %v164
        %v677 = vmax.f32 %v421, %v165
        %v678 = vmax.f32 %v422, %v166
        %v679 = vmax.f32 %v423, %v167
        %v680 = vmax.f32 %v424, %v168
        %v681 = vmax.f32 %v425, %v169
        %v682 = vmax.f32 %v426, %v170
        %v683 = vmax.f32 %v427, %v171
        %v684 = vmax.f32 %v428, %v172
        %v685 = vmax.f32 %v429, %v173
        %v686 = vmax.f32 %v430, %v174
        %v687 = vmax.f32 %v431, %v175
        %v688 = vmax.f32 %v432, %v176
        %v689 = vmax.f32 %v433, %v177
        %v690 = vmax.f32 %v434, %v178
        %v691 = vmax.f32 %v435, %v179
        %v692 = vmax.f32 %v436, %v180
        %v693 = vmax.f32 %v437, %v181
        %v694 = vmax.f32 %v438, %v182
        %v695 = vmax.f32 %v439, %v183
        %v696 = vmax.f32 %v440, %v184
        %v697 = vmax.f32 %v441, %v185
        %v698 = vmax.f32 %v442, %v186
        %v699 = vmax.f32 %v443, %v187
        %v700 = vmax.f32 %v444, %v188
        %v701 = vmax.f32 %v445, %v189
        %v702 = vmax.f32 %v446, %v190
        %v703 = vmax.f32 %v447, %v191
        %v704 = vmax.f32 %v448, %v192
        %v705 = vmax.f32 %v449, %v193
        %v706 = vmax.f32 %v450, %v194
        %v707 = vmax.f32 %v451, %v195
        %v708 = vmax.f32 %v452, %v196
        %v709 = vmax.f32 %v453, %v197
        %v710 = vmax.f32 %v454, %v198
        %v711 = vmax.f32 %v455, %v199
        %v712 = vmax.f32 %v456, %v200
        %v713 = vmax.f32 %v457, %v201
        %v714 = vmax.f32 %v458, %v202
        %v715 = vmax.f32 %v459, %v203
        %v716 = vmax.f32 %v460, %v204
        %v717 = vmax.f32 %v461, %v205
        %v718 = vmax.f32 %v462, %v206
        %v719 = vmax.f32 %v463, %v207
        %v720 = vmax.f32 %v464, %v208
        %v721 = vmax.f32 %v465, %v209
        %v722 = vmax.f32 %v466, %v210
        %v723 = vmax.f32 %v467, %v211
        %v724 = vmax.f32 %v468, %v212
        %v725 = vmax.f32 %v469, %v213
        %v726 = vmax.f32 %v470, %v214
        %v727 = vmax.f32 %v471, %v215
        %v728 = vmax.f32 %v472, %v216
        %v729 = vmax.f32 %v473, %v217
        %v730 = vmax.f32 %v474, %v218
        %v731 = vmax.f32 %v475, %v219
        %v732 = vmax.f32 %v476, %v220
        %v733 = vmax.f32 %v477, %v221
        %v734 = vmax.f32 %v478, %v222
        %v735 = vmax.f32 %v479, %v223
        %v736 = vmax.f32 %v480, %v224
        %v737 = vmax.f32 %v481, %v225
        %v738 = vmax.f32 %v482, %v226
        %v739 = vmax.f32 %v483, %v227
        %v740 = vmax.f32 %v484, %v228
        %v741 = vmax.f32 %v485, %v229
        %v742 = vmax.f32 %v486, %v230
        %v743 = vmax.f32 %v487, %v231
        %v744 = vmax.f32 %v488, %v232
        %v745 = vmax.f32 %v489, %v233
        %v746 = vmax.f32 %v490, %v234
        %v747 = vmax.f32 %v491, %v235
        %v748 = vmax.f32 %v492, %v236
        %v749 = vmax.f32 %v493, %v237
        %v750 = vmax.f32 %v494, %v238
        %v751 = vmax.f32 %v495, %v239
        %v752 = vmax.f32 %v496, %v240
        %v753 = vmax.f32 %v497, %v241
        %v754 = vmax.f32 %v498, %v242
        %v755 = vmax.f32 %v499, %v243
        %v756 = vmax.f32 %v500, %v244
        %v757 = vmax.f32 %v501, %v245
        %v758 = vmax.f32 %v502, %v246
        %v759 = vmax.f32 %v503, %v247
        %v760 = vmax.f32 %v504, %v248
        %v761 = vmax.f32 %v505, %v249
        %v762 = vmax.f32 %v506, %v250
        %v763 = vmax.f32 %v507, %v251
        %v764 = vmax.f32 %v508, %v252
        %v765 = vmax.f32 %v509, %v253
        %v766 = vmax.f32 %v510, %v254
        %v767 = vmax.f32 %v511, %v255
        %v768 = vmax.f32 %v512, %v256
        %v769 = vmax.f32 %v513, %v257
        %v770 = vmax.f32 %v514, %v258
        %v771 = vmax.f32 %v515, %v259
        %v772 = vmax.f32 %v516, %v260
        %v773 = vmax.f32 %v517, %v261
        %v774 = vmax.f32 %v518, %v262
        %v775 = vmax.f32 %v519, %v263
        %v776 = vmax.f32 %v520, %v264
        %v777 = vmax.f32 %v521, %v265
        %v778 = vmax.f32 %v522, %v266
        %v779 = vmax.f32 %v523, %v267
        %v780 = vmax.f32 %v524, %v268
        %v781 = vmax.f32 %v525, %v269
        %v782 = vmax.f32 %v526, %v270
        %v783 = vmax.f32 %v527, %v271
        %v784 = vmax.f32 %v528, %v272
        %v785 = vmax.f32 %v529, %v273
        %v786 = vmax.f32 %v530, %v274
        %v787 = vmax.f32 %v531, %v275
        %v788 = vmax.f32 %v532, %v276
        %v789 = vmax.f32 %v533, %v277
        %v790 = vmax.f32 %v534, %v278
        %v791 = vmax.f32 %v535, %v279
        %v792 = vmax.f32 %v536, %v280
        %v793 = vmax.f32 %v537, %v281
        %v794 = vmax.f32 %v538, %v282
        %v795 = vmax.f32 %v539, %v283
        %v796 = vmax.f32 %v540, %v284
        %v797 = vmax.f32 %v541, %v285
        %v798 = vmax.f32 %v542, %v286
        %v799 = vmax.f32 %v543, %v287
        %v800 = vmax.f32 %v544, %v288
        %v801 = vmax.f32 %v545, %v289
        %v802 = vmax.f32 %v546, %v290
        %v803 = vmax.f32 %v547, %v291
        %v804 = vmax.f32 %v548, %v292
        %v805 = vmax.f32 %v549, %v293
        %v806 = vmax.f32 %v550, %v294
        %v807 = vmax.f32 %v551, %v295
        %v808 = vmax.f32 %v552, %v296
        %v809 = vmax.f32 %v553, %v297
        %v810 = vmax.f32 %v554, %v298
        %v811 = vmax.f32 %v555, %v299
        %v812 = vmax.f32 %v556, %v300
        %v813 = vmax.f32 %v557, %v301
        %v814 = vmax.f32 %v558, %v302
        %v815 = vmax.f32 %v559, %v303
        %v816 = vmax.f32 %v560, %v304
        %v817 = vmax.f32 %v561, %v305
        %v818 = vmax.f32 %v562, %v306
        %v819 = vmax.f32 %v563, %v307
        %v820 = vmax.f32 %v564, %v308
        %v821 = vmax.f32 %v565, %v309
        %v822 = vmax.f32 %v566, %v310
        %v823 = vmax.f32 %v567, %v311
        %v824 = vmax.f32 %v568, %v312
        %v825 = vmax.f32 %v569, %v313
        %v826 = vmax.f32 %v570, %v314
        %v827 = vmax.f32 %v571, %v315
        %v828 = vmax.f32 %v572, %v316
        %v829 = vmax.f32 %v573, %v317
        %v830 = vmax.f32 %v574, %v318
        %v831 = vmax.f32 %v575, %v319
        %v832 = vmax.f32 %v576, %v320
        %v833 = vmax.f32 %v577, %v321
        %v834 = vmax.f32 %v578, %v322
        %v835 = vmax.f32 %v579, %v323
        %v836 = vmax.f32 %v580, %v324
        %v837 = vmax.f32 %v581, %v325
        %v838 = vmax.f32 %v582, %v326
        %v839 = vmax.f32 %v583, %v327
        %v840 = vmax.f32 %v584, %v328
        %v841 = vmax.f32 %v585, %v329
        %v842 = vmax.f32 %v586, %v330
        %v843 = vmax.f32 %v587, %v331
        %v844 = vmax.f32 %v588, %v332
        %v845 = vmax.f32 %v589, %v333
        %v846 = vmax.f32 %v590, %v334
        %v847 = vmax.f32 %v591, %v335
        %v848 = vmax.f32 %v592, %v336
        %v849 = vmax.f32 %v593, %v337
        %v850 = vmax.f32 %v594, %v338
        %v851 = vmax.f32 %v595, %v339
        %v852 = vmax.f32 %v596, %v340
        %v853 = vmax.f32 %v597, %v341
        %v854 = vmax.f32 %v598, %v342
        %v855 = vmax.f32 %v599, %v343
        %v856 = vmax.f32 %v600, %v344
        %v857 = vmax.f32 %v601, %v345
        %v858 = vmax.f32 %v602, %v346
        %v859 = vmax.f32 %v603, %v347
        %v860 = vmax.f32 %v604, %v348
        %v861 = vmax.f32 %v605, %v349
        %v862 = vmax.f32 %v606, %v350
        %v863 = vmax.f32 %v607, %v351
        %v864 = vmax.f32 %v608, %v352
        %v865 = vmax.f32 %v609, %v353
        %v866 = vmax.f32 %v610, %v354
        %v867 = vmax.f32 %v611, %v355
        %v868 = vmax.f32 %v612, %v356
        %v869 = vmax.f32 %v613, %v357
        %v870 = vmax.f32 %v614, %v358
        %v871 = vmax.f32 %v615, %v359
        %v872 = vmax.f32 %v616, %v360
        %v873 = vmax.f32 %v617, %v361
        %v874 = vmax.f32 %v618, %v362
        %v875 = vmax.f32 %v619, %v363
        %v876 = vmax.f32 %v620, %v364
        %v877 = vmax.f32 %v621, %v365
        %v878 = vmax.f32 %v622, %v366
        %v879 = vmax.f32 %v623, %v367
        %v880 = vmax.f32 %v624, %v368
        %v881 = vmax.f32 %v625, %v369
        %v882 = vmax.f32 %v626, %v370
        %v883 = vmax.f32 %v627, %v371
        %v884 = vmax.f32 %v628, %v372
        %v885 = vmax.f32 %v629, %v373
        %v886 = vmax.f32 %v630, %v374
        %v887 = vmax.f32 %v631, %v375
        %v888 = vmax.f32 %v632, %v376
        %v889 = vmax.f32 %v633, %v377
        %v890 = vmax.f32 %v634, %v378
        %v891 = vmax.f32 %v635, %v379
        %v892 = vmax.f32 %v636, %v380
        %v893 = vmax.f32 %v637, %v381
        %v894 = vmax.f32 %v638, %v382
        %v895 = vmax.f32 %v639, %v383
        %v896 = vmax.f32 %v640, %v384
        %v897 = vmax.f32 %v641, %v385
        %v898 = vmax.f32 %v642, %v386
        %v899 = vmax.f32 %v643, %v387
        %v900 = vmax.f32 %v644, %v388
        %v901 = vmax.f32 %v645, %v389
        %v902 = vmax.f32 %v646, %v390
        %v903 = vmax.f32 %v647, %v391
        %v904 = vmax.f32 %v648, %v392
        %v905 = vmax.f32 %v649, %v393
        %v906 = vmin.f32 %v650, 6.0
        %v907 = vmin.f32 %v651, 6.0
        %v908 = vmin.f32 %v652, 6.0
        %v909 = vmin.f32 %v653, 6.0
        %v910 = vmin.f32 %v654, 6.0
        %v911 = vmin.f32 %v655, 6.0
        %v912 = vmin.f32 %v656, 6.0
        %v913 = vmin.f32 %v657, 6.0
        %v914 = vmin.f32 %v658, 6.0
        %v915 = vmin.f32 %v659, 6.0
        %v916 = vmin.f32 %v660, 6.0
        %v917 = vmin.f32 %v661, 6.0
        %v918 = vmin.f32 %v662, 6.0
        %v919 = vmin.f32 %v663, 6.0
        %v920 = vmin.f32 %v664, 6.0
        %v921 = vmin.f32 %v665, 6.0
        %v922 = vmin.f32 %v666, 6.0
        %v923 = vmin.f32 %v667, 6.0
        %v924 = vmin.f32 %v668, 6.0
        %v925 = vmin.f32 %v669, 6.0
        %v926 = vmin.f32 %v670, 6.0
        %v927 = vmin.f32 %v671, 6.0
        %v928 = vmin.f32 %v672, 6.0
        %v929 = vmin.f32 %v673, 6.0
        %v930 = vmin.f32 %v674, 6.0
        %v931 = vmin.f32 %v675, 6.0
        %v932 = vmin.f32 %v676, 6.0
        %v933 = vmin.f32 %v677, 6.0
        %v934 = vmin.f32 %v678, 6.0
        %v935 = vmin.f32 %v679, 6.0
        %v936 = vmin.f32 %v680, 6.0
        %v937 = vmin.f32 %v681, 6.0
        %v938 = vmin.f32 %v682, 6.0
        %v939 = vmin.f32 %v683, 6.0
        %v940 = vmin.f32 %v684, 6.0
        %v941 = vmin.f32 %v685, 6.0
        %v942 = vmin.f32 %v686, 6.0
        %v943 = vmin.f32 %v687, 6.0
        %v944 = vmin.f32 %v688, 6.0
        %v945 = vmin.f32 %v689, 6.0
        %v946 = vmin.f32 %v690, 6.0
        %v947 = vmin.f32 %v691, 6.0
        %v948 = vmin.f32 %v692, 6.0
        %v949 = vmin.f32 %v693, 6.0
        %v950 = vmin.f32 %v694, 6.0
        %v951 = vmin.f32 %v695, 6.0
        %v952 = vmin.f32 %v696, 6.0
        %v953 = vmin.f32 %v697, 6.0
        %v954 = vmin.f32 %v698, 6.0
        %v955 = vmin.f32 %v699, 6.0
        %v956 = vmin.f32 %v700, 6.0
        %v957 = vmin.f32 %v701, 6.0
        %v958 = vmin.f32 %v702, 6.0
        %v959 = vmin.f32 %v703, 6.0
        %v960 = vmin.f32 %v704, 6.0
        %v961 = vmin.f32 %v705, 6.0
        %v962 = vmin.f32 %v706, 6.0
        %v963 = vmin.f32 %v707, 6.0
        %v964 = vmin.f32 %v708, 6.0
        %v965 = vmin.f32 %v709, 6.0
        %v966 = vmin.f32 %v710, 6.0
        %v967 = vmin.f32 %v711, 6.0
        %v968 = vmin.f32 %v712, 6.0
        %v969 = vmin.f32 %v713, 6.0
        %v970 = vmin.f32 %v714, 6.0
        %v971 = vmin.f32 %v715, 6.0
        %v972 = vmin.f32 %v716, 6.0
        %v973 = vmin.f32 %v717, 6.0
        %v974 = vmin.f32 %v718, 6.0
        %v975 = vmin.f32 %v719, 6.0
        %v976 = vmin.f32 %v720, 6.0
        %v977 = vmin.f32 %v721, 6.0
        %v978 = vmin.f32 %v722, 6.0
        %v979 = vmin.f32 %v723, 6.0
        %v980 = vmin.f32 %v724, 6.0
        %v981 = vmin.f32 %v725, 6.0
        %v982 = vmin.f32 %v726, 6.0
        %v983 = vmin.f32 %v727, 6.0
        %v984 = vmin.f32 %v728, 6.0
        %v985 = vmin.f32 %v729, 6.0
        %v986 = vmin.f32 %v730, 6.0
        %v987 = vmin.f32 %v731, 6.0
        %v988 = vmin.f32 %v732, 6.0
        %v989 = vmin.f32 %v733, 6.0
        %v990 = vmin.f32 %v734, 6.0
        %v991 = vmin.f32 %v735, 6.0
        %v992 = vmin.f32 %v736, 6.0
        %v993 = vmin.f32 %v737, 6.0
        %v994 = vmin.f32 %v738, 6.0
        %v995 = vmin.f32 %v739, 6.0
        %v996 = vmin.f32 %v740, 6.0
        %v997 = vmin.f32 %v741, 6.0
        %v998 = vmin.f32 %v742, 6.0
        %v999 = vmin.f32 %v743, 6.0
        %v1000 = vmin.f32 %v744, 6.0
        %v1001 = vmin.f32 %v745, 6.0
        %v1002 = vmin.f32 %v746, 6.0
        %v1003 = vmin.f32 %v747, 6.0
        %v1004 = vmin.f32 %v748, 6.0
        %v1005 = vmin.f32 %v749, 6.0
        %v1006 = vmin.f32 %v750, 6.0
        %v1007 = vmin.f32 %v751, 6.0
        %v1008 = vmin.f32 %v752, 6.0
        %v1009 = vmin.f32 %v753, 6.0
        %v1010 = vmin.f32 %v754, 6.0
        %v1011 = vmin.f32 %v755, 6.0
        %v1012 = vmin.f32 %v756, 6.0
        %v1013 = vmin.f32 %v757, 6.0
        %v1014 = vmin.f32 %v758, 6.0
        %v1015 = vmin.f32 %v759, 6.0
        %v1016 = vmin.f32 %v760, 6.0
        %v1017 = vmin.f32 %v761, 6.0
        %v1018 = vmin.f32 %v762, 6.0
        %v1019 = vmin.f32 %v763, 6.0
        %v1020 = vmin.f32 %v764, 6.0
        %v1021 = vmin.f32 %v765, 6.0
        %v1022 = vmin.f32 %v766, 6.0
        %v1023 = vmin.f32 %v767, 6.0
        %v1024 = vmin.f32 %v768, 6.0
        %v1025 = vmin.f32 %v769, 6.0
        %v1026 = vmin.f32 %v770, 6.0
        %v1027 = vmin.f32 %v771, 6.0
        %v1028 = vmin.f32 %v772, 6.0
        %v1029 = vmin.f32 %v773, 6.0
        %v1030 = vmin.f32 %v774, 6.0
        %v1031 = vmin.f32 %v775, 6.0
        %v1032 = vmin.f32 %v776, 6.0
        %v1033 = vmin.f32 %v777, 6.0
        %v1034 = vmin.f32 %v778, 6.0
        %v1035 = vmin.f32 %v779, 6.0
        %v1036 = vmin.f32 %v780, 6.0
        %v1037 = vmin.f32 %v781, 6.0
        %v1038 = vmin.f32 %v782, 6.0
        %v1039 = vmin.f32 %v783, 6.0
        %v1040 = vmin.f32 %v784, 6.0
        %v1041 = vmin.f32 %v785, 6.0
        %v1042 = vmin.f32 %v786, 6.0
        %v1043 = vmin.f32 %v787, 6.0
        %v1044 = vmin.f32 %v788, 6.0
        %v1045 = vmin.f32 %v789, 6.0
        %v1046 = vmin.f32 %v790, 6.0
        %v1047 = vmin.f32 %v791, 6.0
        %v1048 = vmin.f32 %v792, 6.0
        %v1049 = vmin.f32 %v793, 6.0
        %v1050 = vmin.f32 %v794, 6.0
        %v1051 = vmin.f32 %v795, 6.0
        %v1052 = vmin.f32 %v796, 6.0
        %v1053 = vmin.f32 %v797, 6.0
        %v1054 = vmin.f32 %v798, 6.0
        %v1055 = vmin.f32 %v799, 6.0
        %v1056 = vmin.f32 %v800, 6.0
        %v1057 = vmin.f32 %v801, 6.0
        %v1058 = vmin.f32 %v802, 6.0
        %v1059 = vmin.f32 %v803, 6.0
        %v1060 = vmin.f32 %v804, 6.0
        %v1061 = vmin.f32 %v805, 6.0
        %v1062 = vmin.f32 %v806, 6.0
        %v1063 = vmin.f32 %v807, 6.0
        %v1064 = vmin.f32 %v808, 6.0
        %v1065 = vmin.f32 %v809, 6.0
        %v1066 = vmin.f32 %v810, 6.0
        %v1067 = vmin.f32 %v811, 6.0
        %v1068 = vmin.f32 %v812, 6.0
        %v1069 = vmin.f32 %v813, 6.0
        %v1070 = vmin.f32 %v814, 6.0
        %v1071 = vmin.f32 %v815, 6.0
        %v1072 = vmin.f32 %v816, 6.0
        %v1073 = vmin.f32 %v817, 6.0
        %v1074 = vmin.f32 %v818, 6.0
        %v1075 = vmin.f32 %v819, 6.0
        %v1076 = vmin.f32 %v820, 6.0
        %v1077 = vmin.f32 %v821, 6.0
        %v1078 = vmin.f32 %v822, 6.0
        %v1079 = vmin.f32 %v823, 6.0
        %v1080 = vmin.f32 %v824, 6.0
        %v1081 = vmin.f32 %v825, 6.0
        %v1082 = vmin.f32 %v826, 6.0
        %v1083 = vmin.f32 %v827, 6.0
        %v1084 = vmin.f32 %v828, 6.0
        %v1085 = vmin.f32 %v829, 6.0
        %v1086 = vmin.f32 %v830, 6.0
        %v1087 = vmin.f32 %v831, 6.0
        %v1088 = vmin.f32 %v832, 6.0
        %v1089 = vmin.f32 %v833, 6.0
        %v1090 = vmin.f32 %v834, 6.0
        %v1091 = vmin.f32 %v835, 6.0
        %v1092 = vmin.f32 %v836, 6.0
        %v1093 = vmin.f32 %v837, 6.0
        %v1094 = vmin.f32 %v838, 6.0
        %v1095 = vmin.f32 %v839, 6.0
        %v1096 = vmin.f32 %v840, 6.0
        %v1097 = vmin.f32 %v841, 6.0
        %v1098 = vmin.f32 %v842, 6.0
        %v1099 = vmin.f32 %v843, 6.0
        %v1100 = vmin.f32 %v844, 6.0
        %v1101 = vmin.f32 %v845, 6.0
        %v1102 = vmin.f32 %v846, 6.0
        %v1103 = vmin.f32 %v847, 6.0
        %v1104 = vmin.f32 %v848, 6.0
        %v1105 = vmin.f32 %v849, 6.0
        %v1106 = vmin.f32 %v850, 6.0
        %v1107 = vmin.f32 %v851, 6.0
        %v1108 = vmin.f32 %v852, 6.0
        %v1109 = vmin.f32 %v853, 6.0
        %v1110 = vmin.f32 %v854, 6.0
        %v1111 = vmin.f32 %v855, 6.0
        %v1112 = vmin.f32 %v856, 6.0
        %v1113 = vmin.f32 %v857, 6.0
        %v1114 = vmin.f32 %v858, 6.0
        %v1115 = vmin.f32 %v859, 6.0
        %v1116 = vmin.f32 %v860, 6.0
        %v1117 = vmin.f32 %v861, 6.0
        %v1118 = vmin.f32 %v862, 6.0
        %v1119 = vmin.f32 %v863, 6.0
        %v1120 = vmin.f32 %v864, 6.0
        %v1121 = vmin.f32 %v865, 6.0
        %v1122 = vmin.f32 %v866, 6.0
        %v1123 = vmin.f32 %v867, 6.0
        %v1124 = vmin.f32 %v868, 6.0
        %v1125 = vmin.f32 %v869, 6.0
        %v1126 = vmin.f32 %v870, 6.0
        %v1127 = vmin.f32 %v871, 6.0
        %v1128 = vmin.f32 %v872, 6.0
        %v1129 = vmin.f32 %v873, 6.0
        %v1130 = vmin.f32 %v874, 6.0
        %v1131 = vmin.f32 %v875, 6.0
        %v1132 = vmin.f32 %v876, 6.0
        %v1133 = vmin.f32 %v877, 6.0
        %v1134 = vmin.f32 %v878, 6.0
        %v1135 = vmin.f32 %v879, 6.0
        %v1136 = vmin.f32 %v880, 6.0
        %v1137 = vmin.f32 %v881, 6.0
        %v1138 = vmin.f32 %v882, 6.0
        %v1139 = vmin.f32 %v883, 6.0
        %v1140 = vmin.f32 %v884, 6.0
        %v1141 = vmin.f32 %v885, 6.0
        %v1142 = vmin.f32 %v886, 6.0
        %v1143 = vmin.f32 %v887, 6.0
        %v1144 = vmin.f32 %v888, 6.0
        %v1145 = vmin.f32 %v889, 6.0
        %v1146 = vmin.f32 %v890, 6.0
        %v1147 = vmin.f32 %v891, 6.0
        %v1148 = vmin.f32 %v892, 6.0
        %v1149 = vmin.f32 %v893, 6.0
        %v1150 = vmin.f32 %v894, 6.0
        %v1151 = vmin.f32 %v895, 6.0
        %v1152 = vmin.f32 %v896, 6.0
        %v1153 = vmin.f32 %v897, 6.0
        %v1154 = vmin.f32 %v898, 6.0
        %v1155 = vmin.f32 %v899, 6.0
        %v1156 = vmin.f32 %v900, 6.0
        %v1157 = vmin.f32 %v901, 6.0
        %v1158 = vmin.f32 %v902, 6.0
        %v1159 = vmin.f32 %v903, 6.0
        %v1160 = vmin.f32 %v904, 6.0
        %v1161 = vmin.f32 %v905, 6.0
        %1162 = vst [vmem:[%s135] sm:$0xff] %v906
        %1163 = vst [vmem:[%s135 + $0x8] sm:$0xff] %v907
        %1164 = vst [vmem:[%s135 + $0x10] sm:$0xff] %v908
        %1165 = vst [vmem:[%s135 + $0x18] sm:$0xff] %v909
        %1166 = vst [vmem:[%s135 + $0x20] sm:$0xff] %v910
        %1167 = vst [vmem:[%s135 + $0x28] sm:$0xff] %v911
        %1168 = vst [vmem:[%s135 + $0x30] sm:$0xff] %v912
        %1169 = vst [vmem:[%s135 + $0x38] sm:$0xff] %v913
        %1170 = vst [vmem:[%s135 + $0x40] sm:$0xff] %v914
        %1171 = vst [vmem:[%s135 + $0x48] sm:$0xff] %v915
        %1172 = vst [vmem:[%s135 + $0x50] sm:$0xff] %v916
        %1173 = vst [vmem:[%s135 + $0x58] sm:$0xff] %v917
        %1174 = vst [vmem:[%s135 + $0x60] sm:$0xff] %v918
        %1175 = vst [vmem:[%s135 + $0x68] sm:$0xff] %v919
        %1176 = vst [vmem:[%s135 + $0x70] sm:$0xff] %v920
        %1177 = vst [vmem:[%s135 + $0x78] sm:$0xff] %v921
        %1178 = vst [vmem:[%s135 + $0x80] sm:$0xff] %v922
        %1179 = vst [vmem:[%s135 + $0x88] sm:$0xff] %v923
        %1180 = vst [vmem:[%s135 + $0x90] sm:$0xff] %v924
        %1181 = vst [vmem:[%s135 + $0x98] sm:$0xff] %v925
        %1182 = vst [vmem:[%s135 + $0xa0] sm:$0xff] %v926
        %1183 = vst [vmem:[%s135 + $0xa8] sm:$0xff] %v927
        %1184 = vst [vmem:[%s135 + $0xb0] sm:$0xff] %v928
        %1185 = vst [vmem:[%s135 + $0xb8] sm:$0xff] %v929
        %1186 = vst [vmem:[%s135 + $0xc0] sm:$0xff] %v930
        %1187 = vst [vmem:[%s135 + $0xc8] sm:$0xff] %v931
        %1188 = vst [vmem:[%s135 + $0xd0] sm:$0xff] %v932
        %1189 = vst [vmem:[%s135 + $0xd8] sm:$0xff] %v933
        %1190 = vst [vmem:[%s135 + $0xe0] sm:$0xff] %v934
        %1191 = vst [vmem:[%s135 + $0xe8] sm:$0xff] %v935
        %1192 = vst [vmem:[%s135 + $0xf0] sm:$0xff] %v936
        %1193 = vst [vmem:[%s135 + $0xf8] sm:$0xff] %v937
        %1194 = vst [vmem:[%s135 + $0x100] sm:$0xff] %v938
        %1195 = vst [vmem:[%s135 + $0x108] sm:$0xff] %v939
        %1196 = vst [vmem:[%s135 + $0x110] sm:$0xff] %v940
        %1197 = vst [vmem:[%s135 + $0x118] sm:$0xff] %v941
        %1198 = vst [vmem:[%s135 + $0x120] sm:$0xff] %v942
        %1199 = vst [vmem:[%s135 + $0x128] sm:$0xff] %v943
        %1200 = vst [vmem:[%s135 + $0x130] sm:$0xff] %v944
        %1201 = vst [vmem:[%s135 + $0x138] sm:$0xff] %v945
        %1202 = vst [vmem:[%s135 + $0x140] sm:$0xff] %v946
        %1203 = vst [vmem:[%s135 + $0x148] sm:$0xff] %v947
        %1204 = vst [vmem:[%s135 + $0x150] sm:$0xff] %v948
        %1205 = vst [vmem:[%s135 + $0x158] sm:$0xff] %v949
        %1206 = vst [vmem:[%s135 + $0x160] sm:$0xff] %v950
        %1207 = vst [vmem:[%s135 + $0x168] sm:$0xff] %v951
        %1208 = vst [vmem:[%s135 + $0x170] sm:$0xff] %v952
        %1209 = vst [vmem:[%s135 + $0x178] sm:$0xff] %v953
        %1210 = vst [vmem:[%s135 + $0x180] sm:$0xff] %v954
        %1211 = vst [vmem:[%s135 + $0x188] sm:$0xff] %v955
        %1212 = vst [vmem:[%s135 + $0x190] sm:$0xff] %v956
        %1213 = vst [vmem:[%s135 + $0x198] sm:$0xff] %v957
        %1214 = vst [vmem:[%s135 + $0x1a0] sm:$0xff] %v958
        %1215 = vst [vmem:[%s135 + $0x1a8] sm:$0xff] %v959
        %1216 = vst [vmem:[%s135 + $0x1b0] sm:$0xff] %v960
        %1217 = vst [vmem:[%s135 + $0x1b8] sm:$0xff] %v961
        %1218 = vst [vmem:[%s135 + $0x1c0] sm:$0xff] %v962
        %1219 = vst [vmem:[%s135 + $0x1c8] sm:$0xff] %v963
        %1220 = vst [vmem:[%s135 + $0x1d0] sm:$0xff] %v964
        %1221 = vst [vmem:[%s135 + $0x1d8] sm:$0xff] %v965
        %1222 = vst [vmem:[%s135 + $0x1e0] sm:$0xff] %v966
        %1223 = vst [vmem:[%s135 + $0x1e8] sm:$0xff] %v967
        %1224 = vst [vmem:[%s135 + $0x1f0] sm:$0xff] %v968
        %1225 = vst [vmem:[%s135 + $0x1f8] sm:$0xff] %v969
        %1226 = vst [vmem:[%s135 + $0x200] sm:$0xff] %v970
        %1227 = vst [vmem:[%s135 + $0x208] sm:$0xff] %v971
        %1228 = vst [vmem:[%s135 + $0x210] sm:$0xff] %v972
        %1229 = vst [vmem:[%s135 + $0x218] sm:$0xff] %v973
        %1230 = vst [vmem:[%s135 + $0x220] sm:$0xff] %v974
        %1231 = vst [vmem:[%s135 + $0x228] sm:$0xff] %v975
        %1232 = vst [vmem:[%s135 + $0x230] sm:$0xff] %v976
        %1233 = vst [vmem:[%s135 + $0x238] sm:$0xff] %v977
        %1234 = vst [vmem:[%s135 + $0x240] sm:$0xff] %v978
        %1235 = vst [vmem:[%s135 + $0x248] sm:$0xff] %v979
        %1236 = vst [vmem:[%s135 + $0x250] sm:$0xff] %v980
        %1237 = vst [vmem:[%s135 + $0x258] sm:$0xff] %v981
        %1238 = vst [vmem:[%s135 + $0x260] sm:$0xff] %v982
        %1239 = vst [vmem:[%s135 + $0x268] sm:$0xff] %v983
        %1240 = vst [vmem:[%s135 + $0x270] sm:$0xff] %v984
        %1241 = vst [vmem:[%s135 + $0x278] sm:$0xff] %v985
        %1242 = vst [vmem:[%s135 + $0x280] sm:$0xff] %v986
        %1243 = vst [vmem:[%s135 + $0x288] sm:$0xff] %v987
        %1244 = vst [vmem:[%s135 + $0x290] sm:$0xff] %v988
        %1245 = vst [vmem:[%s135 + $0x298] sm:$0xff] %v989
        %1246 = vst [vmem:[%s135 + $0x2a0] sm:$0xff] %v990
        %1247 = vst [vmem:[%s135 + $0x2a8] sm:$0xff] %v991
        %1248 = vst [vmem:[%s135 + $0x2b0] sm:$0xff] %v992
        %1249 = vst [vmem:[%s135 + $0x2b8] sm:$0xff] %v993
        %1250 = vst [vmem:[%s135 + $0x2c0] sm:$0xff] %v994
        %1251 = vst [vmem:[%s135 + $0x2c8] sm:$0xff] %v995
        %1252 = vst [vmem:[%s135 + $0x2d0] sm:$0xff] %v996
        %1253 = vst [vmem:[%s135 + $0x2d8] sm:$0xff] %v997
        %1254 = vst [vmem:[%s135 + $0x2e0] sm:$0xff] %v998
        %1255 = vst [vmem:[%s135 + $0x2e8] sm:$0xff] %v999
        %1256 = vst [vmem:[%s135 + $0x2f0] sm:$0xff] %v1000
        %1257 = vst [vmem:[%s135 + $0x2f8] sm:$0xff] %v1001
        %1258 = vst [vmem:[%s135 + $0x300] sm:$0xff] %v1002
        %1259 = vst [vmem:[%s135 + $0x308] sm:$0xff] %v1003
        %1260 = vst [vmem:[%s135 + $0x310] sm:$0xff] %v1004
        %1261 = vst [vmem:[%s135 + $0x318] sm:$0xff] %v1005
        %1262 = vst [vmem:[%s135 + $0x320] sm:$0xff] %v1006
        %1263 = vst [vmem:[%s135 + $0x328] sm:$0xff] %v1007
        %1264 = vst [vmem:[%s135 + $0x330] sm:$0xff] %v1008
        %1265 = vst [vmem:[%s135 + $0x338] sm:$0xff] %v1009
        %1266 = vst [vmem:[%s135 + $0x340] sm:$0xff] %v1010
        %1267 = vst [vmem:[%s135 + $0x348] sm:$0xff] %v1011
        %1268 = vst [vmem:[%s135 + $0x350] sm:$0xff] %v1012
        %1269 = vst [vmem:[%s135 + $0x358] sm:$0xff] %v1013
        %1270 = vst [vmem:[%s135 + $0x360] sm:$0xff] %v1014
        %1271 = vst [vmem:[%s135 + $0x368] sm:$0xff] %v1015
        %1272 = vst [vmem:[%s135 + $0x370] sm:$0xff] %v1016
        %1273 = vst [vmem:[%s135 + $0x378] sm:$0xff] %v1017
        %1274 = vst [vmem:[%s135 + $0x380] sm:$0xff] %v1018
        %1275 = vst [vmem:[%s135 + $0x388] sm:$0xff] %v1019
        %1276 = vst [vmem:[%s135 + $0x390] sm:$0xff] %v1020
        %1277 = vst [vmem:[%s135 + $0x398] sm:$0xff] %v1021
        %1278 = vst [vmem:[%s135 + $0x3a0] sm:$0xff] %v1022
        %1279 = vst [vmem:[%s135 + $0x3a8] sm:$0xff] %v1023
        %1280 = vst [vmem:[%s135 + $0x3b0] sm:$0xff] %v1024
        %1281 = vst [vmem:[%s135 + $0x3b8] sm:$0xff] %v1025
        %1282 = vst [vmem:[%s135 + $0x3c0] sm:$0xff] %v1026
        %1283 = vst [vmem:[%s135 + $0x3c8] sm:$0xff] %v1027
        %1284 = vst [vmem:[%s135 + $0x3d0] sm:$0xff] %v1028
        %1285 = vst [vmem:[%s135 + $0x3d8] sm:$0xff] %v1029
        %1286 = vst [vmem:[%s135 + $0x3e0] sm:$0xff] %v1030
        %1287 = vst [vmem:[%s135 + $0x3e8] sm:$0xff] %v1031
        %1288 = vst [vmem:[%s135 + $0x3f0] sm:$0xff] %v1032
        %1289 = vst [vmem:[%s135 + $0x3f8] sm:$0xff] %v1033
        %1290 = vst [vmem:[%s135 + $0x400] sm:$0xff] %v1034
        %1291 = vst [vmem:[%s135 + $0x408] sm:$0xff] %v1035
        %1292 = vst [vmem:[%s135 + $0x410] sm:$0xff] %v1036
        %1293 = vst [vmem:[%s135 + $0x418] sm:$0xff] %v1037
        %1294 = vst [vmem:[%s135 + $0x420] sm:$0xff] %v1038
        %1295 = vst [vmem:[%s135 + $0x428] sm:$0xff] %v1039
        %1296 = vst [vmem:[%s135 + $0x430] sm:$0xff] %v1040
        %1297 = vst [vmem:[%s135 + $0x438] sm:$0xff] %v1041
        %1298 = vst [vmem:[%s135 + $0x440] sm:$0xff] %v1042
        %1299 = vst [vmem:[%s135 + $0x448] sm:$0xff] %v1043
        %1300 = vst [vmem:[%s135 + $0x450] sm:$0xff] %v1044
        %1301 = vst [vmem:[%s135 + $0x458] sm:$0xff] %v1045
        %1302 = vst [vmem:[%s135 + $0x460] sm:$0xff] %v1046
        %1303 = vst [vmem:[%s135 + $0x468] sm:$0xff] %v1047
        %1304 = vst [vmem:[%s135 + $0x470] sm:$0xff] %v1048
        %1305 = vst [vmem:[%s135 + $0x478] sm:$0xff] %v1049
        %1306 = vst [vmem:[%s135 + $0x480] sm:$0xff] %v1050
        %1307 = vst [vmem:[%s135 + $0x488] sm:$0xff] %v1051
        %1308 = vst [vmem:[%s135 + $0x490] sm:$0xff] %v1052
        %1309 = vst [vmem:[%s135 + $0x498] sm:$0xff] %v1053
        %1310 = vst [vmem:[%s135 + $0x4a0] sm:$0xff] %v1054
        %1311 = vst [vmem:[%s135 + $0x4a8] sm:$0xff] %v1055
        %1312 = vst [vmem:[%s135 + $0x4b0] sm:$0xff] %v1056
        %1313 = vst [vmem:[%s135 + $0x4b8] sm:$0xff] %v1057
        %1314 = vst [vmem:[%s135 + $0x4c0] sm:$0xff] %v1058
        %1315 = vst [vmem:[%s135 + $0x4c8] sm:$0xff] %v1059
        %1316 = vst [vmem:[%s135 + $0x4d0] sm:$0xff] %v1060
        %1317 = vst [vmem:[%s135 + $0x4d8] sm:$0xff] %v1061
        %1318 = vst [vmem:[%s135 + $0x4e0] sm:$0xff] %v1062
        %1319 = vst [vmem:[%s135 + $0x4e8] sm:$0xff] %v1063
        %1320 = vst [vmem:[%s135 + $0x4f0] sm:$0xff] %v1064
        %1321 = vst [vmem:[%s135 + $0x4f8] sm:$0xff] %v1065
        %1322 = vst [vmem:[%s135 + $0x500] sm:$0xff] %v1066
        %1323 = vst [vmem:[%s135 + $0x508] sm:$0xff] %v1067
        %1324 = vst [vmem:[%s135 + $0x510] sm:$0xff] %v1068
        %1325 = vst [vmem:[%s135 + $0x518] sm:$0xff] %v1069
        %1326 = vst [vmem:[%s135 + $0x520] sm:$0xff] %v1070
        %1327 = vst [vmem:[%s135 + $0x528] sm:$0xff] %v1071
        %1328 = vst [vmem:[%s135 + $0x530] sm:$0xff] %v1072
        %1329 = vst [vmem:[%s135 + $0x538] sm:$0xff] %v1073
        %1330 = vst [vmem:[%s135 + $0x540] sm:$0xff] %v1074
        %1331 = vst [vmem:[%s135 + $0x548] sm:$0xff] %v1075
        %1332 = vst [vmem:[%s135 + $0x550] sm:$0xff] %v1076
        %1333 = vst [vmem:[%s135 + $0x558] sm:$0xff] %v1077
        %1334 = vst [vmem:[%s135 + $0x560] sm:$0xff] %v1078
        %1335 = vst [vmem:[%s135 + $0x568] sm:$0xff] %v1079
        %1336 = vst [vmem:[%s135 + $0x570] sm:$0xff] %v1080
        %1337 = vst [vmem:[%s135 + $0x578] sm:$0xff] %v1081
        %1338 = vst [vmem:[%s135 + $0x580] sm:$0xff] %v1082
        %1339 = vst [vmem:[%s135 + $0x588] sm:$0xff] %v1083
        %1340 = vst [vmem:[%s135 + $0x590] sm:$0xff] %v1084
        %1341 = vst [vmem:[%s135 + $0x598] sm:$0xff] %v1085
        %1342 = vst [vmem:[%s135 + $0x5a0] sm:$0xff] %v1086
        %1343 = vst [vmem:[%s135 + $0x5a8] sm:$0xff] %v1087
        %1344 = vst [vmem:[%s135 + $0x5b0] sm:$0xff] %v1088
        %1345 = vst [vmem:[%s135 + $0x5b8] sm:$0xff] %v1089
        %1346 = vst [vmem:[%s135 + $0x5c0] sm:$0xff] %v1090
        %1347 = vst [vmem:[%s135 + $0x5c8] sm:$0xff] %v1091
        %1348 = vst [vmem:[%s135 + $0x5d0] sm:$0xff] %v1092
        %1349 = vst [vmem:[%s135 + $0x5d8] sm:$0xff] %v1093
        %1350 = vst [vmem:[%s135 + $0x5e0] sm:$0xff] %v1094
        %1351 = vst [vmem:[%s135 + $0x5e8] sm:$0xff] %v1095
        %1352 = vst [vmem:[%s135 + $0x5f0] sm:$0xff] %v1096
        %1353 = vst [vmem:[%s135 + $0x5f8] sm:$0xff] %v1097
        %1354 = vst [vmem:[%s135 + $0x600] sm:$0xff] %v1098
        %1355 = vst [vmem:[%s135 + $0x608] sm:$0xff] %v1099
        %1356 = vst [vmem:[%s135 + $0x610] sm:$0xff] %v1100
        %1357 = vst [vmem:[%s135 + $0x618] sm:$0xff] %v1101
        %1358 = vst [vmem:[%s135 + $0x620] sm:$0xff] %v1102
        %1359 = vst [vmem:[%s135 + $0x628] sm:$0xff] %v1103
        %1360 = vst [vmem:[%s135 + $0x630] sm:$0xff] %v1104
        %1361 = vst [vmem:[%s135 + $0x638] sm:$0xff] %v1105
        %1362 = vst [vmem:[%s135 + $0x640] sm:$0xff] %v1106
        %1363 = vst [vmem:[%s135 + $0x648] sm:$0xff] %v1107
        %1364 = vst [vmem:[%s135 + $0x650] sm:$0xff] %v1108
        %1365 = vst [vmem:[%s135 + $0x658] sm:$0xff] %v1109
        %1366 = vst [vmem:[%s135 + $0x660] sm:$0xff] %v1110
        %1367 = vst [vmem:[%s135 + $0x668] sm:$0xff] %v1111
        %1368 = vst [vmem:[%s135 + $0x670] sm:$0xff] %v1112
        %1369 = vst [vmem:[%s135 + $0x678] sm:$0xff] %v1113
        %1370 = vst [vmem:[%s135 + $0x680] sm:$0xff] %v1114
        %1371 = vst [vmem:[%s135 + $0x688] sm:$0xff] %v1115
        %1372 = vst [vmem:[%s135 + $0x690] sm:$0xff] %v1116
        %1373 = vst [vmem:[%s135 + $0x698] sm:$0xff] %v1117
        %1374 = vst [vmem:[%s135 + $0x6a0] sm:$0xff] %v1118
        %1375 = vst [vmem:[%s135 + $0x6a8] sm:$0xff] %v1119
        %1376 = vst [vmem:[%s135 + $0x6b0] sm:$0xff] %v1120
        %1377 = vst [vmem:[%s135 + $0x6b8] sm:$0xff] %v1121
        %1378 = vst [vmem:[%s135 + $0x6c0] sm:$0xff] %v1122
        %1379 = vst [vmem:[%s135 + $0x6c8] sm:$0xff] %v1123
        %1380 = vst [vmem:[%s135 + $0x6d0] sm:$0xff] %v1124
        %1381 = vst [vmem:[%s135 + $0x6d8] sm:$0xff] %v1125
        %1382 = vst [vmem:[%s135 + $0x6e0] sm:$0xff] %v1126
        %1383 = vst [vmem:[%s135 + $0x6e8] sm:$0xff] %v1127
        %1384 = vst [vmem:[%s135 + $0x6f0] sm:$0xff] %v1128
        %1385 = vst [vmem:[%s135 + $0x6f8] sm:$0xff] %v1129
        %1386 = vst [vmem:[%s135 + $0x700] sm:$0xff] %v1130
        %1387 = vst [vmem:[%s135 + $0x708] sm:$0xff] %v1131
        %1388 = vst [vmem:[%s135 + $0x710] sm:$0xff] %v1132
        %1389 = vst [vmem:[%s135 + $0x718] sm:$0xff] %v1133
        %1390 = vst [vmem:[%s135 + $0x720] sm:$0xff] %v1134
        %1391 = vst [vmem:[%s135 + $0x728] sm:$0xff] %v1135
        %1392 = vst [vmem:[%s135 + $0x730] sm:$0xff] %v1136
        %1393 = vst [vmem:[%s135 + $0x738] sm:$0xff] %v1137
        %1394 = vst [vmem:[%s135 + $0x740] sm:$0xff] %v1138
        %1395 = vst [vmem:[%s135 + $0x748] sm:$0xff] %v1139
        %1396 = vst [vmem:[%s135 + $0x750] sm:$0xff] %v1140
        %1397 = vst [vmem:[%s135 + $0x758] sm:$0xff] %v1141
        %1398 = vst [vmem:[%s135 + $0x760] sm:$0xff] %v1142
        %1399 = vst [vmem:[%s135 + $0x768] sm:$0xff] %v1143
        %1400 = vst [vmem:[%s135 + $0x770] sm:$0xff] %v1144
        %1401 = vst [vmem:[%s135 + $0x778] sm:$0xff] %v1145
        %1402 = vst [vmem:[%s135 + $0x780] sm:$0xff] %v1146
        %1403 = vst [vmem:[%s135 + $0x788] sm:$0xff] %v1147
        %1404 = vst [vmem:[%s135 + $0x790] sm:$0xff] %v1148
        %1405 = vst [vmem:[%s135 + $0x798] sm:$0xff] %v1149
        %1406 = vst [vmem:[%s135 + $0x7a0] sm:$0xff] %v1150
        %1407 = vst [vmem:[%s135 + $0x7a8] sm:$0xff] %v1151
        %1408 = vst [vmem:[%s135 + $0x7b0] sm:$0xff] %v1152
        %1409 = vst [vmem:[%s135 + $0x7b8] sm:$0xff] %v1153
        %1410 = vst [vmem:[%s135 + $0x7c0] sm:$0xff] %v1154
        %1411 = vst [vmem:[%s135 + $0x7c8] sm:$0xff] %v1155
        %1412 = vst [vmem:[%s135 + $0x7d0] sm:$0xff] %v1156
        %1413 = vst [vmem:[%s135 + $0x7d8] sm:$0xff] %v1157
        %1414 = vst [vmem:[%s135 + $0x7e0] sm:$0xff] %v1158
        %1415 = vst [vmem:[%s135 + $0x7e8] sm:$0xff] %v1159
        %1416 = vst [vmem:[%s135 + $0x7f0] sm:$0xff] %v1160
        %1417 = vst [vmem:[%s135 + $0x7f8] sm:$0xff] %v1161
        %s1418 = sand.u32 %s52, 1
        %s1419 = scalar_lea.sflag [#allocation4], %s1418
        %s1420 = sand.u32 %s52, 1
        %s1421 = smul.addr %s1420, 2048
        %s1422 = scalar_lea.vmem [#allocation5], %s1421
        // Predicated region
        $region29: #{tpu_custom_call.1} parent=23 // pred_check
          %p1423 = pneg %p62
        $region30: #{tpu_custom_call.1} parent=23 // pred_check_branch
          %1425 = sbr.rel (%p1423) target = $region32
        $region31: #{tpu_custom_call.1} parent=23 // pred_region
          %s1426 = smul.u32 16, %s18
          %s1428 = ssub.s32 32768, 32768
          %1429 = vsyncadd %s1419, %s1428
          %s1430 = smul.addr %s1426, 16
          %s1431 = smul.addr %s1430, 128
          %s1432 = scalar_lea.hbm %s1, %s1431
          %s1433 = sshll.u32 %s1422, 4
          %s1434 = int_to_ptr.vmem [resolvable:$true] %s1433
          %1439 = dma.vmem_to_hbm [thread:$0]  %s1434, 32768, %s1432, %s1419, 2048, 2048, 128
        $region32: #{tpu_custom_call.1} parent=23 // pred_fallthru
          _
      $region24: #{tpu_custom_call.1} parent=5 // pred_fallthru
        _
      %p1440 = scmp.le.s32.totalorder 2, %s13
      // Predicated region
      $region33: #{tpu_custom_call.1} parent=5 // pred_check
        %p1441 = pneg %p1440
      $region34: #{tpu_custom_call.1} parent=5 // pred_check_branch
        %1443 = sbr.rel (%p1441) target = $region36
      $region35: #{tpu_custom_call.1} parent=5 // pred_region
        %s1444 = ssub.s32 %s13, 2
        // Predicated region
        $region37: #{tpu_custom_call.1} parent=35 // pred_check
          %p1445 = pneg %p68
        $region38: #{tpu_custom_call.1} parent=35 // pred_check_branch
          %1447 = sbr.rel (%p1445) target = $region40
        $region39: #{tpu_custom_call.1} parent=35 // pred_region
          %s1448 = sand.u32 %s53, 1
          %s1449 = scalar_lea.sflag [#allocation4], %s1448
          %s1450 = sand.u32 %s53, 1
          %s1451 = smul.addr %s1450, 2048
          %s1452 = scalar_lea.vmem [#allocation5], %s1451
          %1453 = dma.done %s1449, 32768
        $region40: #{tpu_custom_call.1} parent=35 // pred_fallthru
          _
      $region36: #{tpu_custom_call.1} parent=5 // pred_fallthru
        _
    $region6: #{tpu_custom_call.1} parent=1 // loop_footer
      %s17 = sadd.s32 1, %s13
    $region7: #{tpu_custom_call.1} parent=1 // loop_footer_branch
      %12 = sbr.rel target = $region3
    $region8: #{tpu_custom_call.1} parent=1 // loop_exit
      _
    %1454 = vsyncpa [#allocation3], 1
    %s1455 = scalar_lea.sflag [#allocation3], 1
    %1456 = vsyncpa %s1455, 1
    %1457 = vsyncpa [#allocation4], 1
    %s1458 = scalar_lea.sflag [#allocation4], 1
    %1459 = vsyncpa %s1458, 1

</llo_original>
